<compile_context>
chip_gen: v7x
topology: tpu7x:2x2x1
jax: 0.10.0
libtpu: 0.0.40
codegen_flags: <defaults>
</compile_context>

<pallas_src>
import jax
import jax.numpy as jnp
from jax.experimental import pallas as pl
from jax.experimental.pallas import tpu as pltpu

MXU_ALIGN = 256                    # v6e/v7x MXU tile; multiple of 128 => fine on v5e
VMEM_LIMIT = 48 * 1024 * 1024      # explicit scoped-VMEM limit (v5e default is only 16 MiB)


def _round_up(x, m):
    return ((x + m - 1) // m) * m


def _pick_tile(n, candidates):
    for t in candidates:
        if t <= n and n % t == 0:
            return t
    return n  # n_pad is always a multiple of 256, so candidates ending in 256 always hit


# --------------------------------------------------------------------------
# Fused path (small N): combine + matmul in one kernel.
# --------------------------------------------------------------------------
def _fused_kernel(f1_ref, f2_ref, a_lhs_ref, a_rhs_ref, h_ref):
    """Grid = (o, i, j, k).  f1/f2 live in SMEM (scalar prefetch).

    a_lhs_ref : VMEM (C, tm, tk)   A[:, i-tile, k-tile]
    a_rhs_ref : VMEM (C, tk, tn)   A[:, k-tile, j-tile]
    h_ref     : VMEM (1, tm, tn)   f32, resident across k (accumulate in place)
    """
    o = pl.program_id(0)

    @pl.when(pl.program_id(3) == 0)
    def _():
        h_ref[...] = jnp.zeros_like(h_ref)

    c_in = a_lhs_ref.shape[0]
    a1 = f1_ref[o, 0] * a_lhs_ref[0]
    a2 = f2_ref[o, 0] * a_rhs_ref[0]
    for c in range(1, c_in):                     # in_channels is tiny: static unroll
        a1 = a1 + f1_ref[o, c] * a_lhs_ref[c]
        a2 = a2 + f2_ref[o, c] * a_rhs_ref[c]

    h_ref[0] += jnp.dot(a1, a2, preferred_element_type=jnp.float32)


def _fused_forward(f1, f2, A, tm, tn, tk):
    out_channels, in_channels = f1.shape
    n_pad = A.shape[-1]
    grid = (out_channels, n_pad // tm, n_pad // tn, n_pad // tk)
    grid_spec = pltpu.PrefetchScalarGridSpec(
        num_scalar_prefetch=2,                   # f1, f2 -> SMEM
        grid=grid,
        in_specs=[
            pl.BlockSpec((in_channels, tm, tk), lambda o, i, j, k, f1, f2: (0, i, k)),
            pl.BlockSpec((in_channels, tk, tn), lambda o, i, j, k, f1, f2: (0, k, j)),
        ],
        out_specs=pl.BlockSpec((1, tm, tn), lambda o, i, j, k, f1, f2: (o, i, j)),
    )
    return pl.pallas_call(
        _fused_kernel,
        out_shape=jax.ShapeDtypeStruct((out_channels, n_pad, n_pad), jnp.float32),
        grid_spec=grid_spec,
        compiler_params=pltpu.CompilerParams(
            dimension_semantics=("parallel", "parallel", "parallel", "arbitrary"),
            vmem_limit_bytes=VMEM_LIMIT),
        cost_estimate=pl.CostEstimate(
            flops=2 * out_channels * n_pad ** 3
                  + 4 * out_channels * in_channels * n_pad * n_pad,
            transcendentals=0,
            bytes_accessed=4 * out_channels * in_channels * n_pad * n_pad
                           * ((n_pad // tm) + (n_pad // tn))
                           + 4 * out_channels * n_pad * n_pad,
        ),
    )(f1, f2, A, A)


# --------------------------------------------------------------------------
# Two-pass path (large N).
# Kernel 1: weighted channel combination (both GTConvs in one pass over A).
# --------------------------------------------------------------------------
def _combine_kernel(f1_ref, f2_ref, a_ref, a1_ref, a2_ref):
    """One grid step = one (row, col) tile of the adjacency stack.

    f1_ref, f2_ref : SMEM (out_channels, in_channels)   softmax'd filters
    a_ref          : VMEM (in_channels, tr, tc) f32      adjacency tile
    a1_ref, a2_ref : VMEM (out_channels, tr, tc) bf16    combined tiles
    """
    c_in = a_ref.shape[0]
    o_out = a1_ref.shape[0]
    acc1 = [None] * o_out
    acc2 = [None] * o_out
    # c outer: read each A channel from VMEM exactly once (halves vld pressure),
    # accumulate into all 2*O accumulators.
    for c in range(c_in):
        x = a_ref[c]
        for o in range(o_out):
            t1 = f1_ref[o, c] * x
            t2 = f2_ref[o, c] * x
            acc1[o] = t1 if c == 0 else acc1[o] + t1
            acc2[o] = t2 if c == 0 else acc2[o] + t2
    for o in range(o_out):
        a1_ref[o] = acc1[o].astype(a1_ref.dtype)
        a2_ref[o] = acc2[o].astype(a2_ref.dtype)


def _combine(f1, f2, A, tr, tc):
    out_channels, in_channels = f1.shape
    n_pad = A.shape[-1]
    grid_spec = pltpu.PrefetchScalarGridSpec(
        num_scalar_prefetch=2,                   # f1, f2 -> SMEM
        grid=(n_pad // tr, n_pad // tc),
        in_specs=[
            pl.BlockSpec((in_channels, tr, tc), lambda i, j, f1, f2: (0, i, j)),
        ],
        out_specs=[
            pl.BlockSpec((out_channels, tr, tc), lambda i, j, f1, f2: (0, i, j)),
            pl.BlockSpec((out_channels, tr, tc), lambda i, j, f1, f2: (0, i, j)),
        ],
    )
    return pl.pallas_call(
        _combine_kernel,
        out_shape=(
            jax.ShapeDtypeStruct((out_channels, n_pad, n_pad), jnp.bfloat16),
            jax.ShapeDtypeStruct((out_channels, n_pad, n_pad), jnp.bfloat16),
        ),
        grid_spec=grid_spec,
        compiler_params=pltpu.CompilerParams(
            dimension_semantics=("parallel", "parallel"),
            vmem_limit_bytes=VMEM_LIMIT),
        cost_estimate=pl.CostEstimate(
            flops=4 * out_channels * in_channels * n_pad * n_pad,
            transcendentals=0,
            bytes_accessed=4 * in_channels * n_pad * n_pad
                           + 2 * 2 * out_channels * n_pad * n_pad,
        ),
    )(f1, f2, A)


# --------------------------------------------------------------------------
# Kernel 2: tiled batched matmul H[o] = A1[o] @ A2[o] on the MXU.
# bf16 inputs, f32 accumulation directly into the k-resident output block.
# --------------------------------------------------------------------------
def _matmul_kernel(a1_ref, a2_ref, h_ref):
    """Grid = (o, i, j, k); k is the reduction (output block is k-invariant)."""
    @pl.when(pl.program_id(3) == 0)
    def _():
        h_ref[...] = jnp.zeros_like(h_ref)

    h_ref[0] += jnp.dot(a1_ref[0], a2_ref[0], preferred_element_type=jnp.float32)


def _batched_matmul(A1, A2, tm, tn, tk):
    out_channels, n_pad, _ = A1.shape
    in_bytes = jnp.dtype(A1.dtype).itemsize
    grid = (out_channels, n_pad // tm, n_pad // tn, n_pad // tk)
    grid_spec = pltpu.PrefetchScalarGridSpec(
        num_scalar_prefetch=0,
        grid=grid,
        in_specs=[
            pl.BlockSpec((1, tm, tk), lambda o, i, j, k: (o, i, k)),
            pl.BlockSpec((1, tk, tn), lambda o, i, j, k: (o, k, j)),
        ],
        out_specs=pl.BlockSpec((1, tm, tn), lambda o, i, j, k: (o, i, j)),
    )
    return pl.pallas_call(
        _matmul_kernel,
        out_shape=jax.ShapeDtypeStruct((out_channels, n_pad, n_pad), jnp.float32),
        grid_spec=grid_spec,
        compiler_params=pltpu.CompilerParams(
            dimension_semantics=("parallel", "parallel", "parallel", "arbitrary"),
            vmem_limit_bytes=VMEM_LIMIT),
        cost_estimate=pl.CostEstimate(
            flops=2 * out_channels * n_pad ** 3,
            transcendentals=0,
            bytes_accessed=in_bytes * out_channels * n_pad * n_pad
                           * ((n_pad // tn) + (n_pad // tm))
                           + 4 * out_channels * n_pad * n_pad,
        ),
    )(A1, A2)


# --------------------------------------------------------------------------
# GTLayer.forward (first=True)
# --------------------------------------------------------------------------
def gt_layer_forward(A_dense, w1, w2, *, fuse_threshold=1024):
    """A_dense: (in_channels, N, N); w1, w2: (out_channels, in_channels).

    Returns (H, W): H is (out_channels, N, N) f32, W = [softmax(w1), softmax(w2)].
    """
    n = A_dense.shape[-1]

    # Row-wise softmax of the tiny (O, C) weights (glue; also returned as W).
    f1 = jax.nn.softmax(w1.astype(jnp.float32), axis=1)
    f2 = jax.nn.softmax(w2.astype(jnp.float32), axis=1)

    # Pad N to a multiple of 256 (fills the 256x256 MXU on v6e/v7x; still
    # 128-aligned for v5e).  Zero rows/cols don't change the matmul.
    n_pad = _round_up(n, MXU_ALIGN)
    A = A_dense.astype(jnp.float32)
    if n_pad != n:
        A = jnp.pad(A, ((0, 0), (0, n_pad - n), (0, n_pad - n)))

    if n_pad <= fuse_threshold:
        # Small graph: one fused kernel, f32 throughout (overhead-dominated
        # regime, so precision is free and the A1/A2 round-trip is pure cost).
        t = _pick_tile(n_pad, (512, 256))
        H = _fused_forward(f1, f2, A, t, t, t)
    else:
        # Large graph: bandwidth-bound combine (bf16 outputs, big lane-heavy
        # tiles) + MXU matmul with bf16 inputs / f32 accumulation.
        tc = _pick_tile(n_pad, (1024, 512, 256))
        tr = 256
        A1, A2 = _combine(f1, f2, A, tr, tc)

        tm = _pick_tile(n_pad, (1024, 512, 256))
        tn = tm
        tk = _pick_tile(n_pad, (512, 256))
        H = _batched_matmul(A1, A2, tm, tn, tk)

    if n_pad != n:
        H = H[:, :n, :n]
    return H, [f1, f2]


def _reference(A_dense, w1, w2):
    f1 = jax.nn.softmax(w1, axis=1)
    f2 = jax.nn.softmax(w2, axis=1)
    A1 = jnp.einsum("oc,cnm->onm", f1, A_dense)
    A2 = jnp.einsum("oc,cnm->onm", f2, A_dense)
    H = jnp.einsum("onk,okm->onm", A1, A2)
    return H, [f1, f2]


def _make_inputs(key, in_channels, out_channels, num_nodes):
    k_a_val, k_a_mask, k_w1, k_w2 = jax.random.split(key, 4)
    # Dense adjacency stack (sparse-ish: ~10% nonzeros), deterministic.
    vals = jax.random.uniform(k_a_val, (in_channels, num_nodes, num_nodes),
                              dtype=jnp.float32)
    mask = (jax.random.uniform(k_a_mask, (in_channels, num_nodes, num_nodes))
            < 0.1).astype(jnp.float32)
    A_dense = vals * mask
    # GTConv weights: nn.init.normal_(std=0.01), shape (out_channels, in_channels).
    w1 = 0.01 * jax.random.normal(k_w1, (out_channels, in_channels), jnp.float32)
    w2 = 0.01 * jax.random.normal(k_w2, (out_channels, in_channels), jnp.float32)
    return A_dense, w1, w2


if __name__ == "__main__":
    in_channels = 4      # number of edge types in A
    out_channels = 2     # GT channels

    key = jax.random.PRNGKey(0)
    key1, key2 = jax.random.split(key)

    # --- Path 1: fused kernel (small N, f32 throughout) ------------------
    A_dense, w1, w2 = _make_inputs(key1, in_channels, out_channels, num_nodes=128)
    H, W = gt_layer_forward(A_dense, w1, w2)
    H = jax.block_until_ready(H)
    H_ref, W_ref = _reference(A_dense, w1, w2)
    assert jnp.allclose(H, H_ref, atol=1e-4, rtol=1e-4), "fused H mismatch vs reference"
    assert jnp.allclose(W[0], W_ref[0], atol=1e-6)
    assert jnp.allclose(W[1], W_ref[1], atol=1e-6)

    # --- Path 2: two-pass combine(bf16) + MXU matmul (forced) ------------
    A_dense2, w1b, w2b = _make_inputs(key2, in_channels, out_channels, num_nodes=200)
    H2, W2 = gt_layer_forward(A_dense2, w1b, w2b, fuse_threshold=0)
    H2 = jax.block_until_ready(H2)
    H2_ref, W2_ref = _reference(A_dense2, w1b, w2b)
    # bf16 A1/A2 intermediates (f32 MXU accumulation): expect ~1e-3..1e-2 rel err.
    assert jnp.allclose(H2, H2_ref, atol=1e-3, rtol=3e-2), "two-pass H mismatch vs reference"
    assert jnp.allclose(W2[0], W2_ref[0], atol=1e-6)
    assert jnp.allclose(W2[1], W2_ref[1], atol=1e-6)

    print("KERNEL_OK")
</pallas_src>

<mosaic_0001>
module attributes {stable_mosaic.version = 11 : i64} {
  func.func @_fused_kernel(%arg0: i32, %arg1: i32, %arg2: i32, %arg3: i32, %arg4: memref<2x4xf32, #tpu.memory_space<smem>>, %arg5: memref<2x4xf32, #tpu.memory_space<smem>>, %arg6: memref<4x256x256xf32, #tpu.memory_space<vmem>>, %arg7: memref<4x256x256xf32, #tpu.memory_space<vmem>>, %arg8: memref<1x256x256xf32, #tpu.memory_space<vmem>>) attributes {dimension_semantics = [#tpu.dimension_semantics<parallel>, #tpu.dimension_semantics<parallel>, #tpu.dimension_semantics<parallel>, #tpu.dimension_semantics<arbitrary>], iteration_bounds = array<i64: 2, 1, 1, 1>, scalar_prefetch = 2 : i64, scratch_operands = 0 : i64, tpu.core_type = #tpu.core_type<tc>, window_params = [{transform_indices = @transform_0, window_bounds = array<i64: 4, 256, 256>}, {transform_indices = @transform_1, window_bounds = array<i64: 4, 256, 256>}, {transform_indices = @transform_2, window_bounds = array<i64: 1, 256, 256>}]} {
    %c0_i32 = arith.constant 0 : i32
    %0 = arith.cmpi eq, %arg3, %c0_i32 : i32
    %1 = arith.extui %0 : i1 to i32
    %c0_i32_0 = arith.constant 0 : i32
    %2 = arith.cmpi ne, %1, %c0_i32_0 : i32
    scf.if %2 {
      %cst_35 = arith.constant 0.000000e+00 : f32
      %64 = vector.broadcast %cst_35 : f32 to vector<1x256x256xf32>
      %c0_36 = arith.constant 0 : index
      %c0_37 = arith.constant 0 : index
      %c0_38 = arith.constant 0 : index
      %65 = vector.load %arg8[%c0_36, %c0_37, %c0_38] : memref<1x256x256xf32, #tpu.memory_space<vmem>>, vector<1x256x256xf32>
      tpu.vector_store %arg8[%c0_36, %c0_37, %c0_38], %64 {strides = array<i32>} : memref<1x256x256xf32, #tpu.memory_space<vmem>>, vector<1x256x256xf32>,
    } else {
    }
    %3 = arith.index_cast %arg0 : i32 to index
    %c0 = arith.constant 0 : index
    %4 = memref.load %arg4[%3, %c0] : memref<2x4xf32, #tpu.memory_space<smem>>
    %c0_1 = arith.constant 0 : index
    %c0_2 = arith.constant 0 : index
    %c0_3 = arith.constant 0 : index
    %5 = vector.load %arg6[%c0_1, %c0_2, %c0_3] : memref<4x256x256xf32, #tpu.memory_space<vmem>>, vector<1x256x256xf32>
    %6 = vector.shape_cast %5 : vector<1x256x256xf32> to vector<256x256xf32>
    %7 = vector.broadcast %4 : f32 to vector<256x256xf32>
    %8 = arith.mulf %7, %6 : vector<256x256xf32>
    %9 = arith.index_cast %arg0 : i32 to index
    %c0_4 = arith.constant 0 : index
    %10 = memref.load %arg5[%9, %c0_4] : memref<2x4xf32, #tpu.memory_space<smem>>
    %c0_5 = arith.constant 0 : index
    %c0_6 = arith.constant 0 : index
    %c0_7 = arith.constant 0 : index
    %11 = vector.load %arg7[%c0_5, %c0_6, %c0_7] : memref<4x256x256xf32, #tpu.memory_space<vmem>>, vector<1x256x256xf32>
    %12 = vector.shape_cast %11 : vector<1x256x256xf32> to vector<256x256xf32>
    %13 = vector.broadcast %10 : f32 to vector<256x256xf32>
    %14 = arith.mulf %13, %12 : vector<256x256xf32>
    %15 = arith.index_cast %arg0 : i32 to index
    %c1 = arith.constant 1 : index
    %16 = memref.load %arg4[%15, %c1] : memref<2x4xf32, #tpu.memory_space<smem>>
    %c1_8 = arith.constant 1 : index
    %c0_9 = arith.constant 0 : index
    %c0_10 = arith.constant 0 : index
    %17 = vector.load %arg6[%c1_8, %c0_9, %c0_10] : memref<4x256x256xf32, #tpu.memory_space<vmem>>, vector<1x256x256xf32>
    %18 = vector.shape_cast %17 : vector<1x256x256xf32> to vector<256x256xf32>
    %19 = vector.broadcast %16 : f32 to vector<256x256xf32>
    %20 = arith.mulf %19, %18 : vector<256x256xf32>
    %21 = arith.addf %8, %20 : vector<256x256xf32>
    %22 = arith.index_cast %arg0 : i32 to index
    %c1_11 = arith.constant 1 : index
    %23 = memref.load %arg5[%22, %c1_11] : memref<2x4xf32, #tpu.memory_space<smem>>
    %c1_12 = arith.constant 1 : index
    %c0_13 = arith.constant 0 : index
    %c0_14 = arith.constant 0 : index
    %24 = vector.load %arg7[%c1_12, %c0_13, %c0_14] : memref<4x256x256xf32, #tpu.memory_space<vmem>>, vector<1x256x256xf32>
    %25 = vector.shape_cast %24 : vector<1x256x256xf32> to vector<256x256xf32>
    %26 = vector.broadcast %23 : f32 to vector<256x256xf32>
    %27 = arith.mulf %26, %25 : vector<256x256xf32>
    %28 = arith.addf %14, %27 : vector<256x256xf32>
    %29 = arith.index_cast %arg0 : i32 to index
    %c2 = arith.constant 2 : index
    %30 = memref.load %arg4[%29, %c2] : memref<2x4xf32, #tpu.memory_space<smem>>
    %c2_15 = arith.constant 2 : index
    %c0_16 = arith.constant 0 : index
    %c0_17 = arith.constant 0 : index
    %31 = vector.load %arg6[%c2_15, %c0_16, %c0_17] : memref<4x256x256xf32, #tpu.memory_space<vmem>>, vector<1x256x256xf32>
    %32 = vector.shape_cast %31 : vector<1x256x256xf32> to vector<256x256xf32>
    %33 = vector.broadcast %30 : f32 to vector<256x256xf32>
    %34 = arith.mulf %33, %32 : vector<256x256xf32>
    %35 = arith.addf %21, %34 : vector<256x256xf32>
    %36 = arith.index_cast %arg0 : i32 to index
    %c2_18 = arith.constant 2 : index
    %37 = memref.load %arg5[%36, %c2_18] : memref<2x4xf32, #tpu.memory_space<smem>>
    %c2_19 = arith.constant 2 : index
    %c0_20 = arith.constant 0 : index
    %c0_21 = arith.constant 0 : index
    %38 = vector.load %arg7[%c2_19, %c0_20, %c0_21] : memref<4x256x256xf32, #tpu.memory_space<vmem>>, vector<1x256x256xf32>
    %39 = vector.shape_cast %38 : vector<1x256x256xf32> to vector<256x256xf32>
    %40 = vector.broadcast %37 : f32 to vector<256x256xf32>
    %41 = arith.mulf %40, %39 : vector<256x256xf32>
    %42 = arith.addf %28, %41 : vector<256x256xf32>
    %43 = arith.index_cast %arg0 : i32 to index
    %c3 = arith.constant 3 : index
    %44 = memref.load %arg4[%43, %c3] : memref<2x4xf32, #tpu.memory_space<smem>>
    %c3_22 = arith.constant 3 : index
    %c0_23 = arith.constant 0 : index
    %c0_24 = arith.constant 0 : index
    %45 = vector.load %arg6[%c3_22, %c0_23, %c0_24] : memref<4x256x256xf32, #tpu.memory_space<vmem>>, vector<1x256x256xf32>
    %46 = vector.shape_cast %45 : vector<1x256x256xf32> to vector<256x256xf32>
    %47 = vector.broadcast %44 : f32 to vector<256x256xf32>
    %48 = arith.mulf %47, %46 : vector<256x256xf32>
    %49 = arith.addf %35, %48 : vector<256x256xf32>
    %50 = arith.index_cast %arg0 : i32 to index
    %c3_25 = arith.constant 3 : index
    %51 = memref.load %arg5[%50, %c3_25] : memref<2x4xf32, #tpu.memory_space<smem>>
    %c3_26 = arith.constant 3 : index
    %c0_27 = arith.constant 0 : index
    %c0_28 = arith.constant 0 : index
    %52 = vector.load %arg7[%c3_26, %c0_27, %c0_28] : memref<4x256x256xf32, #tpu.memory_space<vmem>>, vector<1x256x256xf32>
    %53 = vector.shape_cast %52 : vector<1x256x256xf32> to vector<256x256xf32>
    %54 = vector.broadcast %51 : f32 to vector<256x256xf32>
    %55 = arith.mulf %54, %53 : vector<256x256xf32>
    %56 = arith.addf %42, %55 : vector<256x256xf32>
    %c0_29 = arith.constant 0 : index
    %c0_30 = arith.constant 0 : index
    %c0_31 = arith.constant 0 : index
    %57 = vector.load %arg8[%c0_29, %c0_30, %c0_31] : memref<1x256x256xf32, #tpu.memory_space<vmem>>, vector<1x256x256xf32>
    %58 = vector.shape_cast %57 : vector<1x256x256xf32> to vector<256x256xf32>
    %cst = arith.constant dense<0.000000e+00> : vector<256x256xf32>
    %59 = tpu.matmul %49, %56, %cst {dimension_numbers = #tpu.dot_dimension_numbers<[1], [0], [0], [1], [0, 0, 1, 1], [], []>} : vector<256x256xf32>, vector<256x256xf32>, vector<256x256xf32> -> vector<256x256xf32>
    %60 = arith.addf %58, %59 : vector<256x256xf32>
    %c0_32 = arith.constant 0 : index
    %c0_33 = arith.constant 0 : index
    %c0_34 = arith.constant 0 : index
    %61 = vector.load %arg8[%c0_32, %c0_33, %c0_34] : memref<1x256x256xf32, #tpu.memory_space<vmem>>, vector<1x256x256xf32>
    %62 = vector.shape_cast %61 : vector<1x256x256xf32> to vector<256x256xf32>
    %63 = vector.shape_cast %60 : vector<256x256xf32> to vector<1x256x256xf32>
    tpu.vector_store %arg8[%c0_32, %c0_33, %c0_34], %63 {strides = array<i32>} : memref<1x256x256xf32, #tpu.memory_space<vmem>>, vector<1x256x256xf32>,
    return
  }
  func.func @transform_0(%arg0: i32, %arg1: i32, %arg2: i32, %arg3: i32, %arg4: memref<2x4xf32, #tpu.memory_space<smem>>, %arg5: memref<2x4xf32, #tpu.memory_space<smem>>) -> (i32, i32, i32) {
    %c0_i32 = arith.constant 0 : i32
    %c0_i32_0 = arith.constant 0 : i32
    return %c0_i32, %arg1, %arg3 : i32, i32, i32
  }
  func.func @transform_1(%arg0: i32, %arg1: i32, %arg2: i32, %arg3: i32, %arg4: memref<2x4xf32, #tpu.memory_space<smem>>, %arg5: memref<2x4xf32, #tpu.memory_space<smem>>) -> (i32, i32, i32) {
    %c0_i32 = arith.constant 0 : i32
    %c0_i32_0 = arith.constant 0 : i32
    return %c0_i32, %arg3, %arg2 : i32, i32, i32
  }
  func.func @transform_2(%arg0: i32, %arg1: i32, %arg2: i32, %arg3: i32, %arg4: memref<2x4xf32, #tpu.memory_space<smem>>, %arg5: memref<2x4xf32, #tpu.memory_space<smem>>) -> (i32, i32, i32) {
    %c0_i32 = arith.constant 0 : i32
    return %arg0, %arg1, %arg2 : i32, i32, i32
  }
}

</mosaic_0001>

<llo_original>
// kernel: tpu_custom_call.1
$region0: #{tpu_custom_call.1}
  #allocation0 [shape = 'u32[]', space=smem, size = 0x4, offset = 0x4, fixed_abs, tag = 'smem constant byte address 0x4 - core index']
  #allocation1 [shape = 'u32[144,128]{1,0:T(1,128)}', space=vmem, size = 0x12000, scoped, tag = 'internal scratch']
  #allocation2 [shape = 's32[1]{0}', space=sflag, size = 0x4, scoped, tag = 'scoped memory for tpu_custom_call.1']
  #allocation3 [shape = 'u8[1024]{0}', space=smem, size = 0x400, scoped, tag = 'prefetched SMEM operand 0']
  #allocation4 [shape = 'u8[1024]{0}', space=smem, size = 0x400, scoped, tag = 'prefetched SMEM operand 1']
  %s0 = inlined_call_operand.hbm [shape: f32[2,4], index: 0, kind: input, shape index: {}]
  %s1 = inlined_call_operand.vmem [shape: f32[2,4], index: 1, kind: input, shape index: {}]
  %s2 = inlined_call_operand.hbm [shape: f32[4,256,256], index: 2, kind: input, shape index: {}]
  %s3 = inlined_call_operand.hbm [shape: f32[4,256,256], index: 3, kind: input, shape index: {}]
  %s4 = inlined_call_operand.hbm [shape: f32[2,256,256], index: 4, kind: output, shape index: {}]
  %s5 = sld [smem:[#allocation0]]
  $region53: #{tpu_custom_call.1} parent=0
    _
  %s7 = ssub.s32 1, %s5
  %s8 = scalar_select 0, %s7, %s5
  %10 = dma.hbm_to_smem %s0, 32, [#allocation3], [#allocation2]
  %s11 = sshll.u32 %s1, 4
  %s12 = int_to_ptr.vmem [resolvable:$true] %s11
  %14 = dma.vmem_to_smem %s12, 32, [#allocation4], [#allocation2]
  %15 = dma.done [#allocation2], 64
  %16 = sfence
  $region1: #{tpu_custom_call.1} parent=0
    #allocation5 [shape = 'u8[1048576]{0}', space=vmem, size = 0x100000, scoped, tag = 'input window, operand 2, single buffered']
    #allocation6 [shape = 's32[2]{0}', space=sflag, size = 0x8, scoped, tag = 'scoped memory for tpu_custom_call.1']
    #allocation7 [shape = 's32[2]{0}', space=sflag, size = 0x8, scoped, tag = 'scoped memory for tpu_custom_call.1']
    #allocation8 [shape = 'u8[1048576]{0}', space=vmem, size = 0x100000, scoped, tag = 'input window, operand 3, single buffered']
    #allocation9 [shape = 's32[1]{0}', space=sflag, size = 0x4, scoped, tag = 'scoped memory for tpu_custom_call.1']
    #allocation10 [shape = 'u8[524288]{0}', space=vmem, size = 0x80000, scoped, tag = 'output window, operand 0']
    %17 = vsyncpa [#allocation6], 0
    %18 = vsyncpa [#allocation9], 0
    %19 = vsyncpa [#allocation7], 0
    %s20 = scalar_lea.sflag [#allocation7], 1
    %21 = vsyncpa %s20, 0
    loop: start=0, step=1, limit=4
    $region2: #{tpu_custom_call.1} parent=1 // loop_pre_header
      _
    $region3: #{tpu_custom_call.1} parent=1 // loop_header
      %s23 = sphi 0, %s27
      %p24 = scmp.ge.s32.totalorder %s23, 4
      %s30 = sphi 0, %s56
      %s31 = sphi 0, %s52
      %s32 = sphi 0, %s48
      %s33 = sphi 0, %s44
      %s34 = sphi 0, %s30
      %s35 = sphi 0, %s31
      %s36 = sphi 0, %s32
      %s37 = sphi 0, %s33
      %s38 = sphi 0, %s34
      %s39 = sphi 0, %s35
      %s40 = sphi 0, %s36
      %s41 = sphi 0, %s37
      %s61 = sphi 0, %s63
      %s64 = sphi 0, %s61
      %s65 = sphi 0, %s64
      %s81 = sphi 0, %s65
      %s89 = sphi 0, %s91
      %s92 = sphi 0, %s89
      %s93 = sphi 0, %s92
      %s109 = sphi 0, %s93
      %s119 = sphi 0, %s121
      %s122 = sphi 0, %s119
      %s123 = sphi 0, %s122
      %s139 = sphi 0, %s123
    $region4: #{tpu_custom_call.1} parent=1 // loop_header_branch
      %26 = sbr.rel (%p24) target = $region8
    $region5: #{tpu_custom_call.1} parent=1 // loop_body
      %s28 = ssub.s32 %s23, 1
      %s29 = ssub.s32 %s23, 2
      %s42 = sadd.s32 1, %s33
      %p43 = scmp.ge.s32.totalorder %s42, 1
      %s44 = scalar_select %p43, 0, %s42
      %s45 = sadd.s32 1, %s32
      %s46 = scalar_select %p43, %s45, %s32
      %p47 = scmp.ge.s32.totalorder %s46, 1
      %s48 = scalar_select %p47, 0, %s46
      %s49 = sadd.s32 1, %s31
      %s50 = scalar_select %p47, %s49, %s31
      %p51 = scmp.ge.s32.totalorder %s50, 1
      %s52 = scalar_select %p51, 0, %s50
      %s53 = sadd.s32 1, %s30
      %s54 = scalar_select %p51, %s53, %s30
      %p55 = scmp.ge.s32.totalorder %s54, 2
      %s56 = scalar_select %p55, 0, %s54
      %s57 = ssub.s32 %s31, %s52
      %s58 = ssub.s32 %s33, %s44
      %s59 = sor.u32 %s57, %s58
      %p60 = scmp.eq.s32.totalorder %s59, 0
      %s62 = sadd.s32 %s61, 1
      %s63 = scalar_select %p60, %s61, %s62
      %p66 = pneg %p60
      %p67 = scmp.eq.s32.totalorder %s23, 1
      %p68 = por %p66, %p67
      %p69 = scmp.ne.s32.totalorder %s61, %s64
      %p70 = scmp.eq.s32.totalorder %s23, 0
      %p71 = por %p69, %p70
      %p72 = scmp.ne.s32.totalorder %s61, %s64
      %p73 = scmp.eq.s32.totalorder %s28, 1
      %p74 = por %p72, %p73
      %p75 = scmp.ne.s32.totalorder %s64, %s65
      %p76 = scmp.eq.s32.totalorder %s28, 0
      %p77 = por %p75, %p76
      %p78 = scmp.ne.s32.totalorder %s64, %s65
      %p79 = scmp.eq.s32.totalorder %s29, 1
      %p80 = por %p78, %p79
      %p82 = scmp.ne.s32.totalorder %s65, %s81
      %p83 = scmp.eq.s32.totalorder %s29, 0
      %p84 = por %p82, %p83
      %s85 = ssub.s32 %s33, %s44
      %s86 = ssub.s32 %s32, %s48
      %s87 = sor.u32 %s85, %s86
      %p88 = scmp.eq.s32.totalorder %s87, 0
      %s90 = sadd.s32 %s89, 1
      %s91 = scalar_select %p88, %s89, %s90
      %p94 = pneg %p88
      %p95 = scmp.eq.s32.totalorder %s23, 1
      %p96 = por %p94, %p95
      %p97 = scmp.ne.s32.totalorder %s89, %s92
      %p98 = scmp.eq.s32.totalorder %s23, 0
      %p99 = por %p97, %p98
      %p100 = scmp.ne.s32.totalorder %s89, %s92
      %p101 = scmp.eq.s32.totalorder %s28, 1
      %p102 = por %p100, %p101
      %p103 = scmp.ne.s32.totalorder %s92, %s93
      %p104 = scmp.eq.s32.totalorder %s28, 0
      %p105 = por %p103, %p104
      %p106 = scmp.ne.s32.totalorder %s92, %s93
      %p107 = scmp.eq.s32.totalorder %s29, 1
      %p108 = por %p106, %p107
      %p110 = scmp.ne.s32.totalorder %s93, %s109
      %p111 = scmp.eq.s32.totalorder %s29, 0
      %p112 = por %p110, %p111
      %s113 = ssub.s32 %s30, %s56
      %s114 = ssub.s32 %s31, %s52
      %s115 = sor.u32 %s113, %s114
      %s116 = ssub.s32 %s32, %s48
      %s117 = sor.u32 %s115, %s116
      %p118 = scmp.eq.s32.totalorder %s117, 0
      %s120 = sadd.s32 %s119, 1
      %s121 = scalar_select %p118, %s119, %s120
      %p124 = pneg %p118
      %p125 = scmp.eq.s32.totalorder %s23, 1
      %p126 = por %p124, %p125
      %p127 = scmp.ne.s32.totalorder %s119, %s122
      %p128 = scmp.eq.s32.totalorder %s23, 0
      %p129 = por %p127, %p128
      %p130 = scmp.ne.s32.totalorder %s119, %s122
      %p131 = scmp.eq.s32.totalorder %s28, 1
      %p132 = por %p130, %p131
      %p133 = scmp.ne.s32.totalorder %s122, %s123
      %p134 = scmp.eq.s32.totalorder %s28, 0
      %p135 = por %p133, %p134
      %p136 = scmp.ne.s32.totalorder %s122, %s123
      %p137 = scmp.eq.s32.totalorder %s29, 1
      %p138 = por %p136, %p137
      %p140 = scmp.ne.s32.totalorder %s123, %s139
      %p141 = scmp.eq.s32.totalorder %s29, 0
      %p142 = por %p140, %p141
      %p143 = scmp.le.s32.totalorder 1, %s23
      %p144 = scmp.lt.s32.totalorder %s23, 3
      %p145 = pnand %p143, %p144
      %p146 = pneg %p145
      // Predicated region
      $region9: #{tpu_custom_call.1} parent=5 // pred_check
        _
      $region10: #{tpu_custom_call.1} parent=5 // pred_check_branch
        %148 = sbr.rel (%p145) target = $region12
      $region11: #{tpu_custom_call.1} parent=5 // pred_region
        %s149 = ssub.s32 %s23, 1
        // Predicated region
        $region13: #{tpu_custom_call.1} parent=11 // pred_check
          %p150 = pneg %p77
        $region14: #{tpu_custom_call.1} parent=11 // pred_check_branch
          %152 = sbr.rel (%p150) target = $region16
        $region15: #{tpu_custom_call.1} parent=11 // pred_region
          %s153 = smul.u32 32, %s35
          %s154 = smul.u32 2, %s37
          %s156 = ssub.s32 32768, 32768
          %157 = vsyncadd [#allocation6], %s156
          %s158 = smul.addr %s153, 2
          %s159 = sadd.s32 %s154, %s158
          %s160 = smul.addr %s159, 128
          %s161 = scalar_lea.hbm %s2, %s160
          %s162 = sshll.u32 [#allocation5], 4
          %s163 = int_to_ptr.vmem [resolvable:$true] %s162
          %168 = dma.hbm_to_vmem [thread:$0]  %s161, 32768, %s163, [#allocation6], 256, 256, 16
        $region16: #{tpu_custom_call.1} parent=11 // pred_fallthru
          _
        // Predicated region
        $region17: #{tpu_custom_call.1} parent=11 // pred_check
          %p169 = pneg %p105
        $region18: #{tpu_custom_call.1} parent=11 // pred_check_branch
          %171 = sbr.rel (%p169) target = $region20
        $region19: #{tpu_custom_call.1} parent=11 // pred_region
          %s172 = smul.u32 32, %s37
          %s173 = smul.u32 2, %s36
          %s175 = ssub.s32 32768, 32768
          %176 = vsyncadd [#allocation9], %s175
          %s177 = smul.addr %s172, 2
          %s178 = sadd.s32 %s173, %s177
          %s179 = smul.addr %s178, 128
          %s180 = scalar_lea.hbm %s3, %s179
          %s181 = sshll.u32 [#allocation8], 4
          %s182 = int_to_ptr.vmem [resolvable:$true] %s181
          %187 = dma.hbm_to_vmem [thread:$0]  %s180, 32768, %s182, [#allocation9], 256, 256, 16
        $region20: #{tpu_custom_call.1} parent=11 // pred_fallthru
          _
      $region12: #{tpu_custom_call.1} parent=5 // pred_fallthru
        _
      %p188 = scmp.lt.s32.totalorder %s23, 2
      // Predicated region
      $region21: #{tpu_custom_call.1} parent=5 // pred_check
        %p189 = pneg %p188
      $region22: #{tpu_custom_call.1} parent=5 // pred_check_branch
        %191 = sbr.rel (%p189) target = $region24
      $region23: #{tpu_custom_call.1} parent=5 // pred_region
        _
      $region24: #{tpu_custom_call.1} parent=5 // pred_fallthru
        _
      %p192 = scmp.le.s32.totalorder 1, %s23
      %p193 = scmp.lt.s32.totalorder %s23, 3
      %p194 = pnand %p192, %p193
      %p195 = pneg %p194
      // Predicated region
      $region25: #{tpu_custom_call.1} parent=5 // pred_check
        _
      $region26: #{tpu_custom_call.1} parent=5 // pred_check_branch
        %197 = sbr.rel (%p194) target = $region28
      $region27: #{tpu_custom_call.1} parent=5 // pred_region
        %s198 = ssub.s32 %s23, 1
        // Predicated region
        $region29: #{tpu_custom_call.1} parent=27 // pred_check
          %p199 = pneg %p77
        $region30: #{tpu_custom_call.1} parent=27 // pred_check_branch
          %201 = sbr.rel (%p199) target = $region32
        $region31: #{tpu_custom_call.1} parent=27 // pred_region
          %202 = dma.done [#allocation6], 32768
        $region32: #{tpu_custom_call.1} parent=27 // pred_fallthru
          _
        // Predicated region
        $region33: #{tpu_custom_call.1} parent=27 // pred_check
          %p203 = pneg %p105
        $region34: #{tpu_custom_call.1} parent=27 // pred_check_branch
          %205 = sbr.rel (%p203) target = $region36
        $region35: #{tpu_custom_call.1} parent=27 // pred_region
          %206 = dma.done [#allocation9], 32768
        $region36: #{tpu_custom_call.1} parent=27 // pred_fallthru
          _
        %p207 = pneg %p77
        %p208 = pneg %p74
        %p209 = pneg %p105
        %p210 = pneg %p102
        %p211 = pneg %p135
        %p212 = pneg %p132
        %s213 = sand.u32 %s122, 1
        %s214 = scalar_lea.sflag [#allocation7], %s213
        %s215 = sand.u32 %s122, 1
        %s216 = smul.addr %s215, 512
        %s217 = scalar_lea.vmem [#allocation10], %s216
        %s218 = smul.u32 32, %s35
        %s219 = smul.u32 2, %s37
        %s220 = smul.u32 32, %s37
        %s221 = smul.u32 2, %s36
        %s222 = smul.u32 32, %s35
        %s223 = smul.u32 2, %s36
        %p224 = scmp.eq.s32.totalorder %s37, 0
        // Predicated region
        $region37: #{tpu_custom_call.1} parent=27 // pred_check
          %p225 = pneg %p224
        $region38: #{tpu_custom_call.1} parent=27 // pred_check_branch
          %227 = sbr.rel (%p225) target = $region40
        $region39: #{tpu_custom_call.1} parent=27 // pred_region
          %228 = vst [vmem:[%s217] sm:$0xff] 0.0
          %229 = vst [vmem:[%s217 + $0x8] sm:$0xff] 0.0
          %230 = vst [vmem:[%s217 + $0x10] sm:$0xff] 0.0
          %231 = vst [vmem:[%s217 + $0x18] sm:$0xff] 0.0
          %232 = vst [vmem:[%s217 + $0x20] sm:$0xff] 0.0
          %233 = vst [vmem:[%s217 + $0x28] sm:$0xff] 0.0
          %234 = vst [vmem:[%s217 + $0x30] sm:$0xff] 0.0
          %235 = vst [vmem:[%s217 + $0x38] sm:$0xff] 0.0
          %236 = vst [vmem:[%s217 + $0x40] sm:$0xff] 0.0
          %237 = vst [vmem:[%s217 + $0x48] sm:$0xff] 0.0
          %238 = vst [vmem:[%s217 + $0x50] sm:$0xff] 0.0
          %239 = vst [vmem:[%s217 + $0x58] sm:$0xff] 0.0
          %240 = vst [vmem:[%s217 + $0x60] sm:$0xff] 0.0
          %241 = vst [vmem:[%s217 + $0x68] sm:$0xff] 0.0
          %242 = vst [vmem:[%s217 + $0x70] sm:$0xff] 0.0
          %243 = vst [vmem:[%s217 + $0x78] sm:$0xff] 0.0
          %244 = vst [vmem:[%s217 + $0x80] sm:$0xff] 0.0
          %245 = vst [vmem:[%s217 + $0x88] sm:$0xff] 0.0
          %246 = vst [vmem:[%s217 + $0x90] sm:$0xff] 0.0
          %247 = vst [vmem:[%s217 + $0x98] sm:$0xff] 0.0
          %248 = vst [vmem:[%s217 + $0xa0] sm:$0xff] 0.0
          %249 = vst [vmem:[%s217 + $0xa8] sm:$0xff] 0.0
          %250 = vst [vmem:[%s217 + $0xb0] sm:$0xff] 0.0
          %251 = vst [vmem:[%s217 + $0xb8] sm:$0xff] 0.0
          %252 = vst [vmem:[%s217 + $0xc0] sm:$0xff] 0.0
          %253 = vst [vmem:[%s217 + $0xc8] sm:$0xff] 0.0
          %254 = vst [vmem:[%s217 + $0xd0] sm:$0xff] 0.0
          %255 = vst [vmem:[%s217 + $0xd8] sm:$0xff] 0.0
          %256 = vst [vmem:[%s217 + $0xe0] sm:$0xff] 0.0
          %257 = vst [vmem:[%s217 + $0xe8] sm:$0xff] 0.0
          %258 = vst [vmem:[%s217 + $0xf0] sm:$0xff] 0.0
          %259 = vst [vmem:[%s217 + $0xf8] sm:$0xff] 0.0
          %260 = vst [vmem:[%s217 + $0x100] sm:$0xff] 0.0
          %261 = vst [vmem:[%s217 + $0x108] sm:$0xff] 0.0
          %262 = vst [vmem:[%s217 + $0x110] sm:$0xff] 0.0
          %263 = vst [vmem:[%s217 + $0x118] sm:$0xff] 0.0
          %264 = vst [vmem:[%s217 + $0x120] sm:$0xff] 0.0
          %265 = vst [vmem:[%s217 + $0x128] sm:$0xff] 0.0
          %266 = vst [vmem:[%s217 + $0x130] sm:$0xff] 0.0
          %267 = vst [vmem:[%s217 + $0x138] sm:$0xff] 0.0
          %268 = vst [vmem:[%s217 + $0x140] sm:$0xff] 0.0
          %269 = vst [vmem:[%s217 + $0x148] sm:$0xff] 0.0
          %270 = vst [vmem:[%s217 + $0x150] sm:$0xff] 0.0
          %271 = vst [vmem:[%s217 + $0x158] sm:$0xff] 0.0
          %272 = vst [vmem:[%s217 + $0x160] sm:$0xff] 0.0
          %273 = vst [vmem:[%s217 + $0x168] sm:$0xff] 0.0
          %274 = vst [vmem:[%s217 + $0x170] sm:$0xff] 0.0
          %275 = vst [vmem:[%s217 + $0x178] sm:$0xff] 0.0
          %276 = vst [vmem:[%s217 + $0x180] sm:$0xff] 0.0
          %277 = vst [vmem:[%s217 + $0x188] sm:$0xff] 0.0
          %278 = vst [vmem:[%s217 + $0x190] sm:$0xff] 0.0
          %279 = vst [vmem:[%s217 + $0x198] sm:$0xff] 0.0
          %280 = vst [vmem:[%s217 + $0x1a0] sm:$0xff] 0.0
          %281 = vst [vmem:[%s217 + $0x1a8] sm:$0xff] 0.0
          %282 = vst [vmem:[%s217 + $0x1b0] sm:$0xff] 0.0
          %283 = vst [vmem:[%s217 + $0x1b8] sm:$0xff] 0.0
          %284 = vst [vmem:[%s217 + $0x1c0] sm:$0xff] 0.0
          %285 = vst [vmem:[%s217 + $0x1c8] sm:$0xff] 0.0
          %286 = vst [vmem:[%s217 + $0x1d0] sm:$0xff] 0.0
          %287 = vst [vmem:[%s217 + $0x1d8] sm:$0xff] 0.0
          %288 = vst [vmem:[%s217 + $0x1e0] sm:$0xff] 0.0
          %289 = vst [vmem:[%s217 + $0x1e8] sm:$0xff] 0.0
          %290 = vst [vmem:[%s217 + $0x1f0] sm:$0xff] 0.0
          %291 = vst [vmem:[%s217 + $0x1f8] sm:$0xff] 0.0
        $region40: #{tpu_custom_call.1} parent=27 // pred_fallthru
          _
        %s292 = smul.u32 %s34, 128
        %s293 = sld [smem:[#allocation3 + %s292]]
        %v294 = vld [vmem:[#allocation5] sm:$0xff]
        %v295 = vld [vmem:[#allocation5 + $0x8] sm:$0xff]
        %v296 = vld [vmem:[#allocation5 + $0x10] sm:$0xff]
        %v297 = vld [vmem:[#allocation5 + $0x18] sm:$0xff]
        %v298 = vld [vmem:[#allocation5 + $0x20] sm:$0xff]
        %v299 = vld [vmem:[#allocation5 + $0x28] sm:$0xff]
        %v300 = vld [vmem:[#allocation5 + $0x30] sm:$0xff]
        %v301 = vld [vmem:[#allocation5 + $0x38] sm:$0xff]
        %v302 = vld [vmem:[#allocation5 + $0x40] sm:$0xff]
        %v303 = vld [vmem:[#allocation5 + $0x48] sm:$0xff]
        %v304 = vld [vmem:[#allocation5 + $0x50] sm:$0xff]
        %v305 = vld [vmem:[#allocation5 + $0x58] sm:$0xff]
        %v306 = vld [vmem:[#allocation5 + $0x60] sm:$0xff]
        %v307 = vld [vmem:[#allocation5 + $0x68] sm:$0xff]
        %v308 = vld [vmem:[#allocation5 + $0x70] sm:$0xff]
        %v309 = vld [vmem:[#allocation5 + $0x78] sm:$0xff]
        %v310 = vld [vmem:[#allocation5 + $0x80] sm:$0xff]
        %v311 = vld [vmem:[#allocation5 + $0x88] sm:$0xff]
        %v312 = vld [vmem:[#allocation5 + $0x90] sm:$0xff]
        %v313 = vld [vmem:[#allocation5 + $0x98] sm:$0xff]
        %v314 = vld [vmem:[#allocation5 + $0xa0] sm:$0xff]
        %v315 = vld [vmem:[#allocation5 + $0xa8] sm:$0xff]
        %v316 = vld [vmem:[#allocation5 + $0xb0] sm:$0xff]
        %v317 = vld [vmem:[#allocation5 + $0xb8] sm:$0xff]
        %v318 = vld [vmem:[#allocation5 + $0xc0] sm:$0xff]
        %v319 = vld [vmem:[#allocation5 + $0xc8] sm:$0xff]
        %v320 = vld [vmem:[#allocation5 + $0xd0] sm:$0xff]
        %v321 = vld [vmem:[#allocation5 + $0xd8] sm:$0xff]
        %v322 = vld [vmem:[#allocation5 + $0xe0] sm:$0xff]
        %v323 = vld [vmem:[#allocation5 + $0xe8] sm:$0xff]
        %v324 = vld [vmem:[#allocation5 + $0xf0] sm:$0xff]
        %v325 = vld [vmem:[#allocation5 + $0xf8] sm:$0xff]
        %v326 = vld [vmem:[#allocation5 + $0x100] sm:$0xff]
        %v327 = vld [vmem:[#allocation5 + $0x108] sm:$0xff]
        %v328 = vld [vmem:[#allocation5 + $0x110] sm:$0xff]
        %v329 = vld [vmem:[#allocation5 + $0x118] sm:$0xff]
        %v330 = vld [vmem:[#allocation5 + $0x120] sm:$0xff]
        %v331 = vld [vmem:[#allocation5 + $0x128] sm:$0xff]
        %v332 = vld [vmem:[#allocation5 + $0x130] sm:$0xff]
        %v333 = vld [vmem:[#allocation5 + $0x138] sm:$0xff]
        %v334 = vld [vmem:[#allocation5 + $0x140] sm:$0xff]
        %v335 = vld [vmem:[#allocation5 + $0x148] sm:$0xff]
        %v336 = vld [vmem:[#allocation5 + $0x150] sm:$0xff]
        %v337 = vld [vmem:[#allocation5 + $0x158] sm:$0xff]
        %v338 = vld [vmem:[#allocation5 + $0x160] sm:$0xff]
        %v339 = vld [vmem:[#allocation5 + $0x168] sm:$0xff]
        %v340 = vld [vmem:[#allocation5 + $0x170] sm:$0xff]
        %v341 = vld [vmem:[#allocation5 + $0x178] sm:$0xff]
        %v342 = vld [vmem:[#allocation5 + $0x180] sm:$0xff]
        %v343 = vld [vmem:[#allocation5 + $0x188] sm:$0xff]
        %v344 = vld [vmem:[#allocation5 + $0x190] sm:$0xff]
        %v345 = vld [vmem:[#allocation5 + $0x198] sm:$0xff]
        %v346 = vld [vmem:[#allocation5 + $0x1a0] sm:$0xff]
        %v347 = vld [vmem:[#allocation5 + $0x1a8] sm:$0xff]
        %v348 = vld [vmem:[#allocation5 + $0x1b0] sm:$0xff]
        %v349 = vld [vmem:[#allocation5 + $0x1b8] sm:$0xff]
        %v350 = vld [vmem:[#allocation5 + $0x1c0] sm:$0xff]
        %v351 = vld [vmem:[#allocation5 + $0x1c8] sm:$0xff]
        %v352 = vld [vmem:[#allocation5 + $0x1d0] sm:$0xff]
        %v353 = vld [vmem:[#allocation5 + $0x1d8] sm:$0xff]
        %v354 = vld [vmem:[#allocation5 + $0x1e0] sm:$0xff]
        %v355 = vld [vmem:[#allocation5 + $0x1e8] sm:$0xff]
        %v356 = vld [vmem:[#allocation5 + $0x1f0] sm:$0xff]
        %v357 = vld [vmem:[#allocation5 + $0x1f8] sm:$0xff]
        %v358 = vstv %s293
        %v359 = vmul.f32 %v358, %v294
        %v360 = vmul.f32 %v358, %v295
        %v361 = vmul.f32 %v358, %v296
        %v362 = vmul.f32 %v358, %v297
        %v363 = vmul.f32 %v358, %v298
        %v364 = vmul.f32 %v358, %v299
        %v365 = vmul.f32 %v358, %v300
        %v366 = vmul.f32 %v358, %v301
        %v367 = vmul.f32 %v358, %v302
        %v368 = vmul.f32 %v358, %v303
        %v369 = vmul.f32 %v358, %v304
        %v370 = vmul.f32 %v358, %v305
        %v371 = vmul.f32 %v358, %v306
        %v372 = vmul.f32 %v358, %v307
        %v373 = vmul.f32 %v358, %v308
        %v374 = vmul.f32 %v358, %v309
        %v375 = vmul.f32 %v358, %v310
        %v376 = vmul.f32 %v358, %v311
        %v377 = vmul.f32 %v358, %v312
        %v378 = vmul.f32 %v358, %v313
        %v379 = vmul.f32 %v358, %v314
        %v380 = vmul.f32 %v358, %v315
        %v381 = vmul.f32 %v358, %v316
        %v382 = vmul.f32 %v358, %v317
        %v383 = vmul.f32 %v358, %v318
        %v384 = vmul.f32 %v358, %v319
        %v385 = vmul.f32 %v358, %v320
        %v386 = vmul.f32 %v358, %v321
        %v387 = vmul.f32 %v358, %v322
        %v388 = vmul.f32 %v358, %v323
        %v389 = vmul.f32 %v358, %v324
        %v390 = vmul.f32 %v358, %v325
        %v391 = vmul.f32 %v358, %v326
        %v392 = vmul.f32 %v358, %v327
        %v393 = vmul.f32 %v358, %v328
        %v394 = vmul.f32 %v358, %v329
        %v395 = vmul.f32 %v358, %v330
        %v396 = vmul.f32 %v358, %v331
        %v397 = vmul.f32 %v358, %v332
        %v398 = vmul.f32 %v358, %v333
        %v399 = vmul.f32 %v358, %v334
        %v400 = vmul.f32 %v358, %v335
        %v401 = vmul.f32 %v358, %v336
        %v402 = vmul.f32 %v358, %v337
        %v403 = vmul.f32 %v358, %v338
        %v404 = vmul.f32 %v358, %v339
        %v405 = vmul.f32 %v358, %v340
        %v406 = vmul.f32 %v358, %v341
        %v407 = vmul.f32 %v358, %v342
        %v408 = vmul.f32 %v358, %v343
        %v409 = vmul.f32 %v358, %v344
        %v410 = vmul.f32 %v358, %v345
        %v411 = vmul.f32 %v358, %v346
        %v412 = vmul.f32 %v358, %v347
        %v413 = vmul.f32 %v358, %v348
        %v414 = vmul.f32 %v358, %v349
        %v415 = vmul.f32 %v358, %v350
        %v416 = vmul.f32 %v358, %v351
        %v417 = vmul.f32 %v358, %v352
        %v418 = vmul.f32 %v358, %v353
        %v419 = vmul.f32 %v358, %v354
        %v420 = vmul.f32 %v358, %v355
        %v421 = vmul.f32 %v358, %v356
        %v422 = vmul.f32 %v358, %v357
        %s423 = sld [smem:[#allocation4 + %s292]]
        %v424 = vld [vmem:[#allocation8] sm:$0xff]
        %v425 = vld [vmem:[#allocation8 + $0x8] sm:$0xff]
        %v426 = vld [vmem:[#allocation8 + $0x10] sm:$0xff]
        %v427 = vld [vmem:[#allocation8 + $0x18] sm:$0xff]
        %v428 = vld [vmem:[#allocation8 + $0x20] sm:$0xff]
        %v429 = vld [vmem:[#allocation8 + $0x28] sm:$0xff]
        %v430 = vld [vmem:[#allocation8 + $0x30] sm:$0xff]
        %v431 = vld [vmem:[#allocation8 + $0x38] sm:$0xff]
        %v432 = vld [vmem:[#allocation8 + $0x40] sm:$0xff]
        %v433 = vld [vmem:[#allocation8 + $0x48] sm:$0xff]
        %v434 = vld [vmem:[#allocation8 + $0x50] sm:$0xff]
        %v435 = vld [vmem:[#allocation8 + $0x58] sm:$0xff]
        %v436 = vld [vmem:[#allocation8 + $0x60] sm:$0xff]
        %v437 = vld [vmem:[#allocation8 + $0x68] sm:$0xff]
        %v438 = vld [vmem:[#allocation8 + $0x70] sm:$0xff]
        %v439 = vld [vmem:[#allocation8 + $0x78] sm:$0xff]
        %v440 = vld [vmem:[#allocation8 + $0x80] sm:$0xff]
        %v441 = vld [vmem:[#allocation8 + $0x88] sm:$0xff]
        %v442 = vld [vmem:[#allocation8 + $0x90] sm:$0xff]
        %v443 = vld [vmem:[#allocation8 + $0x98] sm:$0xff]
        %v444 = vld [vmem:[#allocation8 + $0xa0] sm:$0xff]
        %v445 = vld [vmem:[#allocation8 + $0xa8] sm:$0xff]
        %v446 = vld [vmem:[#allocation8 + $0xb0] sm:$0xff]
        %v447 = vld [vmem:[#allocation8 + $0xb8] sm:$0xff]
        %v448 = vld [vmem:[#allocation8 + $0xc0] sm:$0xff]
        %v449 = vld [vmem:[#allocation8 + $0xc8] sm:$0xff]
        %v450 = vld [vmem:[#allocation8 + $0xd0] sm:$0xff]
        %v451 = vld [vmem:[#allocation8 + $0xd8] sm:$0xff]
        %v452 = vld [vmem:[#allocation8 + $0xe0] sm:$0xff]
        %v453 = vld [vmem:[#allocation8 + $0xe8] sm:$0xff]
        %v454 = vld [vmem:[#allocation8 + $0xf0] sm:$0xff]
        %v455 = vld [vmem:[#allocation8 + $0xf8] sm:$0xff]
        %v456 = vld [vmem:[#allocation8 + $0x100] sm:$0xff]
        %v457 = vld [vmem:[#allocation8 + $0x108] sm:$0xff]
        %v458 = vld [vmem:[#allocation8 + $0x110] sm:$0xff]
        %v459 = vld [vmem:[#allocation8 + $0x118] sm:$0xff]
        %v460 = vld [vmem:[#allocation8 + $0x120] sm:$0xff]
        %v461 = vld [vmem:[#allocation8 + $0x128] sm:$0xff]
        %v462 = vld [vmem:[#allocation8 + $0x130] sm:$0xff]
        %v463 = vld [vmem:[#allocation8 + $0x138] sm:$0xff]
        %v464 = vld [vmem:[#allocation8 + $0x140] sm:$0xff]
        %v465 = vld [vmem:[#allocation8 + $0x148] sm:$0xff]
        %v466 = vld [vmem:[#allocation8 + $0x150] sm:$0xff]
        %v467 = vld [vmem:[#allocation8 + $0x158] sm:$0xff]
        %v468 = vld [vmem:[#allocation8 + $0x160] sm:$0xff]
        %v469 = vld [vmem:[#allocation8 + $0x168] sm:$0xff]
        %v470 = vld [vmem:[#allocation8 + $0x170] sm:$0xff]
        %v471 = vld [vmem:[#allocation8 + $0x178] sm:$0xff]
        %v472 = vld [vmem:[#allocation8 + $0x180] sm:$0xff]
        %v473 = vld [vmem:[#allocation8 + $0x188] sm:$0xff]
        %v474 = vld [vmem:[#allocation8 + $0x190] sm:$0xff]
        %v475 = vld [vmem:[#allocation8 + $0x198] sm:$0xff]
        %v476 = vld [vmem:[#allocation8 + $0x1a0] sm:$0xff]
        %v477 = vld [vmem:[#allocation8 + $0x1a8] sm:$0xff]
        %v478 = vld [vmem:[#allocation8 + $0x1b0] sm:$0xff]
        %v479 = vld [vmem:[#allocation8 + $0x1b8] sm:$0xff]
        %v480 = vld [vmem:[#allocation8 + $0x1c0] sm:$0xff]
        %v481 = vld [vmem:[#allocation8 + $0x1c8] sm:$0xff]
        %v482 = vld [vmem:[#allocation8 + $0x1d0] sm:$0xff]
        %v483 = vld [vmem:[#allocation8 + $0x1d8] sm:$0xff]
        %v484 = vld [vmem:[#allocation8 + $0x1e0] sm:$0xff]
        %v485 = vld [vmem:[#allocation8 + $0x1e8] sm:$0xff]
        %v486 = vld [vmem:[#allocation8 + $0x1f0] sm:$0xff]
        %v487 = vld [vmem:[#allocation8 + $0x1f8] sm:$0xff]
        %v488 = vstv %s423
        %v489 = vmul.f32 %v488, %v424
        %v490 = vmul.f32 %v488, %v425
        %v491 = vmul.f32 %v488, %v426
        %v492 = vmul.f32 %v488, %v427
        %v493 = vmul.f32 %v488, %v428
        %v494 = vmul.f32 %v488, %v429
        %v495 = vmul.f32 %v488, %v430
        %v496 = vmul.f32 %v488, %v431
        %v497 = vmul.f32 %v488, %v432
        %v498 = vmul.f32 %v488, %v433
        %v499 = vmul.f32 %v488, %v434
        %v500 = vmul.f32 %v488, %v435
        %v501 = vmul.f32 %v488, %v436
        %v502 = vmul.f32 %v488, %v437
        %v503 = vmul.f32 %v488, %v438
        %v504 = vmul.f32 %v488, %v439
        %v505 = vmul.f32 %v488, %v440
        %v506 = vmul.f32 %v488, %v441
        %v507 = vmul.f32 %v488, %v442
        %v508 = vmul.f32 %v488, %v443
        %v509 = vmul.f32 %v488, %v444
        %v510 = vmul.f32 %v488, %v445
        %v511 = vmul.f32 %v488, %v446
        %v512 = vmul.f32 %v488, %v447
        %v513 = vmul.f32 %v488, %v448
        %v514 = vmul.f32 %v488, %v449
        %v515 = vmul.f32 %v488, %v450
        %v516 = vmul.f32 %v488, %v451
        %v517 = vmul.f32 %v488, %v452
        %v518 = vmul.f32 %v488, %v453
        %v519 = vmul.f32 %v488, %v454
        %v520 = vmul.f32 %v488, %v455
        %v521 = vmul.f32 %v488, %v456
        %v522 = vmul.f32 %v488, %v457
        %v523 = vmul.f32 %v488, %v458
        %v524 = vmul.f32 %v488, %v459
        %v525 = vmul.f32 %v488, %v460
        %v526 = vmul.f32 %v488, %v461
        %v527 = vmul.f32 %v488, %v462
        %v528 = vmul.f32 %v488, %v463
        %v529 = vmul.f32 %v488, %v464
        %v530 = vmul.f32 %v488, %v465
        %v531 = vmul.f32 %v488, %v466
        %v532 = vmul.f32 %v488, %v467
        %v533 = vmul.f32 %v488, %v468
        %v534 = vmul.f32 %v488, %v469
        %v535 = vmul.f32 %v488, %v470
        %v536 = vmul.f32 %v488, %v471
        %v537 = vmul.f32 %v488, %v472
        %v538 = vmul.f32 %v488, %v473
        %v539 = vmul.f32 %v488, %v474
        %v540 = vmul.f32 %v488, %v475
        %v541 = vmul.f32 %v488, %v476
        %v542 = vmul.f32 %v488, %v477
        %v543 = vmul.f32 %v488, %v478
        %v544 = vmul.f32 %v488, %v479
        %v545 = vmul.f32 %v488, %v480
        %v546 = vmul.f32 %v488, %v481
        %v547 = vmul.f32 %v488, %v482
        %v548 = vmul.f32 %v488, %v483
        %v549 = vmul.f32 %v488, %v484
        %v550 = vmul.f32 %v488, %v485
        %v551 = vmul.f32 %v488, %v486
        %v552 = vmul.f32 %v488, %v487
        %s553 = sadd.s32 %s292, 1
        %s554 = sld [smem:[#allocation3 + %s553]]
        %s555 = scalar_lea.vmem [#allocation5], 512
        %v556 = vld [vmem:[%s555] sm:$0xff]
        %v557 = vld [vmem:[%s555 + $0x8] sm:$0xff]
        %v558 = vld [vmem:[%s555 + $0x10] sm:$0xff]
        %v559 = vld [vmem:[%s555 + $0x18] sm:$0xff]
        %v560 = vld [vmem:[%s555 + $0x20] sm:$0xff]
        %v561 = vld [vmem:[%s555 + $0x28] sm:$0xff]
        %v562 = vld [vmem:[%s555 + $0x30] sm:$0xff]
        %v563 = vld [vmem:[%s555 + $0x38] sm:$0xff]
        %v564 = vld [vmem:[%s555 + $0x40] sm:$0xff]
        %v565 = vld [vmem:[%s555 + $0x48] sm:$0xff]
        %v566 = vld [vmem:[%s555 + $0x50] sm:$0xff]
        %v567 = vld [vmem:[%s555 + $0x58] sm:$0xff]
        %v568 = vld [vmem:[%s555 + $0x60] sm:$0xff]
        %v569 = vld [vmem:[%s555 + $0x68] sm:$0xff]
        %v570 = vld [vmem:[%s555 + $0x70] sm:$0xff]
        %v571 = vld [vmem:[%s555 + $0x78] sm:$0xff]
        %v572 = vld [vmem:[%s555 + $0x80] sm:$0xff]
        %v573 = vld [vmem:[%s555 + $0x88] sm:$0xff]
        %v574 = vld [vmem:[%s555 + $0x90] sm:$0xff]
        %v575 = vld [vmem:[%s555 + $0x98] sm:$0xff]
        %v576 = vld [vmem:[%s555 + $0xa0] sm:$0xff]
        %v577 = vld [vmem:[%s555 + $0xa8] sm:$0xff]
        %v578 = vld [vmem:[%s555 + $0xb0] sm:$0xff]
        %v579 = vld [vmem:[%s555 + $0xb8] sm:$0xff]
        %v580 = vld [vmem:[%s555 + $0xc0] sm:$0xff]
        %v581 = vld [vmem:[%s555 + $0xc8] sm:$0xff]
        %v582 = vld [vmem:[%s555 + $0xd0] sm:$0xff]
        %v583 = vld [vmem:[%s555 + $0xd8] sm:$0xff]
        %v584 = vld [vmem:[%s555 + $0xe0] sm:$0xff]
        %v585 = vld [vmem:[%s555 + $0xe8] sm:$0xff]
        %v586 = vld [vmem:[%s555 + $0xf0] sm:$0xff]
        %v587 = vld [vmem:[%s555 + $0xf8] sm:$0xff]
        %v588 = vld [vmem:[%s555 + $0x100] sm:$0xff]
        %v589 = vld [vmem:[%s555 + $0x108] sm:$0xff]
        %v590 = vld [vmem:[%s555 + $0x110] sm:$0xff]
        %v591 = vld [vmem:[%s555 + $0x118] sm:$0xff]
        %v592 = vld [vmem:[%s555 + $0x120] sm:$0xff]
        %v593 = vld [vmem:[%s555 + $0x128] sm:$0xff]
        %v594 = vld [vmem:[%s555 + $0x130] sm:$0xff]
        %v595 = vld [vmem:[%s555 + $0x138] sm:$0xff]
        %v596 = vld [vmem:[%s555 + $0x140] sm:$0xff]
        %v597 = vld [vmem:[%s555 + $0x148] sm:$0xff]
        %v598 = vld [vmem:[%s555 + $0x150] sm:$0xff]
        %v599 = vld [vmem:[%s555 + $0x158] sm:$0xff]
        %v600 = vld [vmem:[%s555 + $0x160] sm:$0xff]
        %v601 = vld [vmem:[%s555 + $0x168] sm:$0xff]
        %v602 = vld [vmem:[%s555 + $0x170] sm:$0xff]
        %v603 = vld [vmem:[%s555 + $0x178] sm:$0xff]
        %v604 = vld [vmem:[%s555 + $0x180] sm:$0xff]
        %v605 = vld [vmem:[%s555 + $0x188] sm:$0xff]
        %v606 = vld [vmem:[%s555 + $0x190] sm:$0xff]
        %v607 = vld [vmem:[%s555 + $0x198] sm:$0xff]
        %v608 = vld [vmem:[%s555 + $0x1a0] sm:$0xff]
        %v609 = vld [vmem:[%s555 + $0x1a8] sm:$0xff]
        %v610 = vld [vmem:[%s555 + $0x1b0] sm:$0xff]
        %v611 = vld [vmem:[%s555 + $0x1b8] sm:$0xff]
        %v612 = vld [vmem:[%s555 + $0x1c0] sm:$0xff]
        %v613 = vld [vmem:[%s555 + $0x1c8] sm:$0xff]
        %v614 = vld [vmem:[%s555 + $0x1d0] sm:$0xff]
        %v615 = vld [vmem:[%s555 + $0x1d8] sm:$0xff]
        %v616 = vld [vmem:[%s555 + $0x1e0] sm:$0xff]
        %v617 = vld [vmem:[%s555 + $0x1e8] sm:$0xff]
        %v618 = vld [vmem:[%s555 + $0x1f0] sm:$0xff]
        %v619 = vld [vmem:[%s555 + $0x1f8] sm:$0xff]
        %v620 = vstv %s554
        %v621 = vmul.f32 %v620, %v556
        %v622 = vmul.f32 %v620, %v557
        %v623 = vmul.f32 %v620, %v558
        %v624 = vmul.f32 %v620, %v559
        %v625 = vmul.f32 %v620, %v560
        %v626 = vmul.f32 %v620, %v561
        %v627 = vmul.f32 %v620, %v562
        %v628 = vmul.f32 %v620, %v563
        %v629 = vmul.f32 %v620, %v564
        %v630 = vmul.f32 %v620, %v565
        %v631 = vmul.f32 %v620, %v566
        %v632 = vmul.f32 %v620, %v567
        %v633 = vmul.f32 %v620, %v568
        %v634 = vmul.f32 %v620, %v569
        %v635 = vmul.f32 %v620, %v570
        %v636 = vmul.f32 %v620, %v571
        %v637 = vmul.f32 %v620, %v572
        %v638 = vmul.f32 %v620, %v573
        %v639 = vmul.f32 %v620, %v574
        %v640 = vmul.f32 %v620, %v575
        %v641 = vmul.f32 %v620, %v576
        %v642 = vmul.f32 %v620, %v577
        %v643 = vmul.f32 %v620, %v578
        %v644 = vmul.f32 %v620, %v579
        %v645 = vmul.f32 %v620, %v580
        %v646 = vmul.f32 %v620, %v581
        %v647 = vmul.f32 %v620, %v582
        %v648 = vmul.f32 %v620, %v583
        %v649 = vmul.f32 %v620, %v584
        %v650 = vmul.f32 %v620, %v585
        %v651 = vmul.f32 %v620, %v586
        %v652 = vmul.f32 %v620, %v587
        %v653 = vmul.f32 %v620, %v588
        %v654 = vmul.f32 %v620, %v589
        %v655 = vmul.f32 %v620, %v590
        %v656 = vmul.f32 %v620, %v591
        %v657 = vmul.f32 %v620, %v592
        %v658 = vmul.f32 %v620, %v593
        %v659 = vmul.f32 %v620, %v594
        %v660 = vmul.f32 %v620, %v595
        %v661 = vmul.f32 %v620, %v596
        %v662 = vmul.f32 %v620, %v597
        %v663 = vmul.f32 %v620, %v598
        %v664 = vmul.f32 %v620, %v599
        %v665 = vmul.f32 %v620, %v600
        %v666 = vmul.f32 %v620, %v601
        %v667 = vmul.f32 %v620, %v602
        %v668 = vmul.f32 %v620, %v603
        %v669 = vmul.f32 %v620, %v604
        %v670 = vmul.f32 %v620, %v605
        %v671 = vmul.f32 %v620, %v606
        %v672 = vmul.f32 %v620, %v607
        %v673 = vmul.f32 %v620, %v608
        %v674 = vmul.f32 %v620, %v609
        %v675 = vmul.f32 %v620, %v610
        %v676 = vmul.f32 %v620, %v611
        %v677 = vmul.f32 %v620, %v612
        %v678 = vmul.f32 %v620, %v613
        %v679 = vmul.f32 %v620, %v614
        %v680 = vmul.f32 %v620, %v615
        %v681 = vmul.f32 %v620, %v616
        %v682 = vmul.f32 %v620, %v617
        %v683 = vmul.f32 %v620, %v618
        %v684 = vmul.f32 %v620, %v619
        %v685 = vadd.f32 %v359, %v621
        %v686 = vadd.f32 %v360, %v622
        %v687 = vadd.f32 %v361, %v623
        %v688 = vadd.f32 %v362, %v624
        %v689 = vadd.f32 %v363, %v625
        %v690 = vadd.f32 %v364, %v626
        %v691 = vadd.f32 %v365, %v627
        %v692 = vadd.f32 %v366, %v628
        %v693 = vadd.f32 %v367, %v629
        %v694 = vadd.f32 %v368, %v630
        %v695 = vadd.f32 %v369, %v631
        %v696 = vadd.f32 %v370, %v632
        %v697 = vadd.f32 %v371, %v633
        %v698 = vadd.f32 %v372, %v634
        %v699 = vadd.f32 %v373, %v635
        %v700 = vadd.f32 %v374, %v636
        %v701 = vadd.f32 %v375, %v637
        %v702 = vadd.f32 %v376, %v638
        %v703 = vadd.f32 %v377, %v639
        %v704 = vadd.f32 %v378, %v640
        %v705 = vadd.f32 %v379, %v641
        %v706 = vadd.f32 %v380, %v642
        %v707 = vadd.f32 %v381, %v643
        %v708 = vadd.f32 %v382, %v644
        %v709 = vadd.f32 %v383, %v645
        %v710 = vadd.f32 %v384, %v646
        %v711 = vadd.f32 %v385, %v647
        %v712 = vadd.f32 %v386, %v648
        %v713 = vadd.f32 %v387, %v649
        %v714 = vadd.f32 %v388, %v650
        %v715 = vadd.f32 %v389, %v651
        %v716 = vadd.f32 %v390, %v652
        %v717 = vadd.f32 %v391, %v653
        %v718 = vadd.f32 %v392, %v654
        %v719 = vadd.f32 %v393, %v655
        %v720 = vadd.f32 %v394, %v656
        %v721 = vadd.f32 %v395, %v657
        %v722 = vadd.f32 %v396, %v658
        %v723 = vadd.f32 %v397, %v659
        %v724 = vadd.f32 %v398, %v660
        %v725 = vadd.f32 %v399, %v661
        %v726 = vadd.f32 %v400, %v662
        %v727 = vadd.f32 %v401, %v663
        %v728 = vadd.f32 %v402, %v664
        %v729 = vadd.f32 %v403, %v665
        %v730 = vadd.f32 %v404, %v666
        %v731 = vadd.f32 %v405, %v667
        %v732 = vadd.f32 %v406, %v668
        %v733 = vadd.f32 %v407, %v669
        %v734 = vadd.f32 %v408, %v670
        %v735 = vadd.f32 %v409, %v671
        %v736 = vadd.f32 %v410, %v672
        %v737 = vadd.f32 %v411, %v673
        %v738 = vadd.f32 %v412, %v674
        %v739 = vadd.f32 %v413, %v675
        %v740 = vadd.f32 %v414, %v676
        %v741 = vadd.f32 %v415, %v677
        %v742 = vadd.f32 %v416, %v678
        %v743 = vadd.f32 %v417, %v679
        %v744 = vadd.f32 %v418, %v680
        %v745 = vadd.f32 %v419, %v681
        %v746 = vadd.f32 %v420, %v682
        %v747 = vadd.f32 %v421, %v683
        %v748 = vadd.f32 %v422, %v684
        %s749 = sld [smem:[#allocation4 + %s553]]
        %s750 = scalar_lea.vmem [#allocation8], 512
        %v751 = vld [vmem:[%s750] sm:$0xff]
        %v752 = vld [vmem:[%s750 + $0x8] sm:$0xff]
        %v753 = vld [vmem:[%s750 + $0x10] sm:$0xff]
        %v754 = vld [vmem:[%s750 + $0x18] sm:$0xff]
        %v755 = vld [vmem:[%s750 + $0x20] sm:$0xff]
        %v756 = vld [vmem:[%s750 + $0x28] sm:$0xff]
        %v757 = vld [vmem:[%s750 + $0x30] sm:$0xff]
        %v758 = vld [vmem:[%s750 + $0x38] sm:$0xff]
        %v759 = vld [vmem:[%s750 + $0x40] sm:$0xff]
        %v760 = vld [vmem:[%s750 + $0x48] sm:$0xff]
        %v761 = vld [vmem:[%s750 + $0x50] sm:$0xff]
        %v762 = vld [vmem:[%s750 + $0x58] sm:$0xff]
        %v763 = vld [vmem:[%s750 + $0x60] sm:$0xff]
        %v764 = vld [vmem:[%s750 + $0x68] sm:$0xff]
        %v765 = vld [vmem:[%s750 + $0x70] sm:$0xff]
        %v766 = vld [vmem:[%s750 + $0x78] sm:$0xff]
        %v767 = vld [vmem:[%s750 + $0x80] sm:$0xff]
        %v768 = vld [vmem:[%s750 + $0x88] sm:$0xff]
        %v769 = vld [vmem:[%s750 + $0x90] sm:$0xff]
        %v770 = vld [vmem:[%s750 + $0x98] sm:$0xff]
        %v771 = vld [vmem:[%s750 + $0xa0] sm:$0xff]
        %v772 = vld [vmem:[%s750 + $0xa8] sm:$0xff]
        %v773 = vld [vmem:[%s750 + $0xb0] sm:$0xff]
        %v774 = vld [vmem:[%s750 + $0xb8] sm:$0xff]
        %v775 = vld [vmem:[%s750 + $0xc0] sm:$0xff]
        %v776 = vld [vmem:[%s750 + $0xc8] sm:$0xff]
        %v777 = vld [vmem:[%s750 + $0xd0] sm:$0xff]
        %v778 = vld [vmem:[%s750 + $0xd8] sm:$0xff]
        %v779 = vld [vmem:[%s750 + $0xe0] sm:$0xff]
        %v780 = vld [vmem:[%s750 + $0xe8] sm:$0xff]
        %v781 = vld [vmem:[%s750 + $0xf0] sm:$0xff]
        %v782 = vld [vmem:[%s750 + $0xf8] sm:$0xff]
        %v783 = vld [vmem:[%s750 + $0x100] sm:$0xff]
        %v784 = vld [vmem:[%s750 + $0x108] sm:$0xff]
        %v785 = vld [vmem:[%s750 + $0x110] sm:$0xff]
        %v786 = vld [vmem:[%s750 + $0x118] sm:$0xff]
        %v787 = vld [vmem:[%s750 + $0x120] sm:$0xff]
        %v788 = vld [vmem:[%s750 + $0x128] sm:$0xff]
        %v789 = vld [vmem:[%s750 + $0x130] sm:$0xff]
        %v790 = vld [vmem:[%s750 + $0x138] sm:$0xff]
        %v791 = vld [vmem:[%s750 + $0x140] sm:$0xff]
        %v792 = vld [vmem:[%s750 + $0x148] sm:$0xff]
        %v793 = vld [vmem:[%s750 + $0x150] sm:$0xff]
        %v794 = vld [vmem:[%s750 + $0x158] sm:$0xff]
        %v795 = vld [vmem:[%s750 + $0x160] sm:$0xff]
        %v796 = vld [vmem:[%s750 + $0x168] sm:$0xff]
        %v797 = vld [vmem:[%s750 + $0x170] sm:$0xff]
        %v798 = vld [vmem:[%s750 + $0x178] sm:$0xff]
        %v799 = vld [vmem:[%s750 + $0x180] sm:$0xff]
        %v800 = vld [vmem:[%s750 + $0x188] sm:$0xff]
        %v801 = vld [vmem:[%s750 + $0x190] sm:$0xff]
        %v802 = vld [vmem:[%s750 + $0x198] sm:$0xff]
        %v803 = vld [vmem:[%s750 + $0x1a0] sm:$0xff]
        %v804 = vld [vmem:[%s750 + $0x1a8] sm:$0xff]
        %v805 = vld [vmem:[%s750 + $0x1b0] sm:$0xff]
        %v806 = vld [vmem:[%s750 + $0x1b8] sm:$0xff]
        %v807 = vld [vmem:[%s750 + $0x1c0] sm:$0xff]
        %v808 = vld [vmem:[%s750 + $0x1c8] sm:$0xff]
        %v809 = vld [vmem:[%s750 + $0x1d0] sm:$0xff]
        %v810 = vld [vmem:[%s750 + $0x1d8] sm:$0xff]
        %v811 = vld [vmem:[%s750 + $0x1e0] sm:$0xff]
        %v812 = vld [vmem:[%s750 + $0x1e8] sm:$0xff]
        %v813 = vld [vmem:[%s750 + $0x1f0] sm:$0xff]
        %v814 = vld [vmem:[%s750 + $0x1f8] sm:$0xff]
        %v815 = vstv %s749
        %v816 = vmul.f32 %v815, %v751
        %v817 = vmul.f32 %v815, %v752
        %v818 = vmul.f32 %v815, %v753
        %v819 = vmul.f32 %v815, %v754
        %v820 = vmul.f32 %v815, %v755
        %v821 = vmul.f32 %v815, %v756
        %v822 = vmul.f32 %v815, %v757
        %v823 = vmul.f32 %v815, %v758
        %v824 = vmul.f32 %v815, %v759
        %v825 = vmul.f32 %v815, %v760
        %v826 = vmul.f32 %v815, %v761
        %v827 = vmul.f32 %v815, %v762
        %v828 = vmul.f32 %v815, %v763
        %v829 = vmul.f32 %v815, %v764
        %v830 = vmul.f32 %v815, %v765
        %v831 = vmul.f32 %v815, %v766
        %v832 = vmul.f32 %v815, %v767
        %v833 = vmul.f32 %v815, %v768
        %v834 = vmul.f32 %v815, %v769
        %v835 = vmul.f32 %v815, %v770
        %v836 = vmul.f32 %v815, %v771
        %v837 = vmul.f32 %v815, %v772
        %v838 = vmul.f32 %v815, %v773
        %v839 = vmul.f32 %v815, %v774
        %v840 = vmul.f32 %v815, %v775
        %v841 = vmul.f32 %v815, %v776
        %v842 = vmul.f32 %v815, %v777
        %v843 = vmul.f32 %v815, %v778
        %v844 = vmul.f32 %v815, %v779
        %v845 = vmul.f32 %v815, %v780
        %v846 = vmul.f32 %v815, %v781
        %v847 = vmul.f32 %v815, %v782
        %v848 = vmul.f32 %v815, %v783
        %v849 = vmul.f32 %v815, %v784
        %v850 = vmul.f32 %v815, %v785
        %v851 = vmul.f32 %v815, %v786
        %v852 = vmul.f32 %v815, %v787
        %v853 = vmul.f32 %v815, %v788
        %v854 = vmul.f32 %v815, %v789
        %v855 = vmul.f32 %v815, %v790
        %v856 = vmul.f32 %v815, %v791
        %v857 = vmul.f32 %v815, %v792
        %v858 = vmul.f32 %v815, %v793
        %v859 = vmul.f32 %v815, %v794
        %v860 = vmul.f32 %v815, %v795
        %v861 = vmul.f32 %v815, %v796
        %v862 = vmul.f32 %v815, %v797
        %v863 = vmul.f32 %v815, %v798
        %v864 = vmul.f32 %v815, %v799
        %v865 = vmul.f32 %v815, %v800
        %v866 = vmul.f32 %v815, %v801
        %v867 = vmul.f32 %v815, %v802
        %v868 = vmul.f32 %v815, %v803
        %v869 = vmul.f32 %v815, %v804
        %v870 = vmul.f32 %v815, %v805
        %v871 = vmul.f32 %v815, %v806
        %v872 = vmul.f32 %v815, %v807
        %v873 = vmul.f32 %v815, %v808
        %v874 = vmul.f32 %v815, %v809
        %v875 = vmul.f32 %v815, %v810
        %v876 = vmul.f32 %v815, %v811
        %v877 = vmul.f32 %v815, %v812
        %v878 = vmul.f32 %v815, %v813
        %v879 = vmul.f32 %v815, %v814
        %v880 = vadd.f32 %v489, %v816
        %v881 = vadd.f32 %v490, %v817
        %v882 = vadd.f32 %v491, %v818
        %v883 = vadd.f32 %v492, %v819
        %v884 = vadd.f32 %v493, %v820
        %v885 = vadd.f32 %v494, %v821
        %v886 = vadd.f32 %v495, %v822
        %v887 = vadd.f32 %v496, %v823
        %v888 = vadd.f32 %v497, %v824
        %v889 = vadd.f32 %v498, %v825
        %v890 = vadd.f32 %v499, %v826
        %v891 = vadd.f32 %v500, %v827
        %v892 = vadd.f32 %v501, %v828
        %v893 = vadd.f32 %v502, %v829
        %v894 = vadd.f32 %v503, %v830
        %v895 = vadd.f32 %v504, %v831
        %v896 = vadd.f32 %v505, %v832
        %v897 = vadd.f32 %v506, %v833
        %v898 = vadd.f32 %v507, %v834
        %v899 = vadd.f32 %v508, %v835
        %v900 = vadd.f32 %v509, %v836
        %v901 = vadd.f32 %v510, %v837
        %v902 = vadd.f32 %v511, %v838
        %v903 = vadd.f32 %v512, %v839
        %v904 = vadd.f32 %v513, %v840
        %v905 = vadd.f32 %v514, %v841
        %v906 = vadd.f32 %v515, %v842
        %v907 = vadd.f32 %v516, %v843
        %v908 = vadd.f32 %v517, %v844
        %v909 = vadd.f32 %v518, %v845
        %v910 = vadd.f32 %v519, %v846
        %v911 = vadd.f32 %v520, %v847
        %v912 = vadd.f32 %v521, %v848
        %v913 = vadd.f32 %v522, %v849
        %v914 = vadd.f32 %v523, %v850
        %v915 = vadd.f32 %v524, %v851
        %v916 = vadd.f32 %v525, %v852
        %v917 = vadd.f32 %v526, %v853
        %v918 = vadd.f32 %v527, %v854
        %v919 = vadd.f32 %v528, %v855
        %v920 = vadd.f32 %v529, %v856
        %v921 = vadd.f32 %v530, %v857
        %v922 = vadd.f32 %v531, %v858
        %v923 = vadd.f32 %v532, %v859
        %v924 = vadd.f32 %v533, %v860
        %v925 = vadd.f32 %v534, %v861
        %v926 = vadd.f32 %v535, %v862
        %v927 = vadd.f32 %v536, %v863
        %v928 = vadd.f32 %v537, %v864
        %v929 = vadd.f32 %v538, %v865
        %v930 = vadd.f32 %v539, %v866
        %v931 = vadd.f32 %v540, %v867
        %v932 = vadd.f32 %v541, %v868
        %v933 = vadd.f32 %v542, %v869
        %v934 = vadd.f32 %v543, %v870
        %v935 = vadd.f32 %v544, %v871
        %v936 = vadd.f32 %v545, %v872
        %v937 = vadd.f32 %v546, %v873
        %v938 = vadd.f32 %v547, %v874
        %v939 = vadd.f32 %v548, %v875
        %v940 = vadd.f32 %v549, %v876
        %v941 = vadd.f32 %v550, %v877
        %v942 = vadd.f32 %v551, %v878
        %v943 = vadd.f32 %v552, %v879
        %s944 = sadd.s32 %s292, 2
        %s945 = sld [smem:[#allocation3 + %s944]]
        %s946 = scalar_lea.vmem [#allocation5], 1024
        %v947 = vld [vmem:[%s946] sm:$0xff]
        %v948 = vld [vmem:[%s946 + $0x8] sm:$0xff]
        %v949 = vld [vmem:[%s946 + $0x10] sm:$0xff]
        %v950 = vld [vmem:[%s946 + $0x18] sm:$0xff]
        %v951 = vld [vmem:[%s946 + $0x20] sm:$0xff]
        %v952 = vld [vmem:[%s946 + $0x28] sm:$0xff]
        %v953 = vld [vmem:[%s946 + $0x30] sm:$0xff]
        %v954 = vld [vmem:[%s946 + $0x38] sm:$0xff]
        %v955 = vld [vmem:[%s946 + $0x40] sm:$0xff]
        %v956 = vld [vmem:[%s946 + $0x48] sm:$0xff]
        %v957 = vld [vmem:[%s946 + $0x50] sm:$0xff]
        %v958 = vld [vmem:[%s946 + $0x58] sm:$0xff]
        %v959 = vld [vmem:[%s946 + $0x60] sm:$0xff]
        %v960 = vld [vmem:[%s946 + $0x68] sm:$0xff]
        %v961 = vld [vmem:[%s946 + $0x70] sm:$0xff]
        %v962 = vld [vmem:[%s946 + $0x78] sm:$0xff]
        %v963 = vld [vmem:[%s946 + $0x80] sm:$0xff]
        %v964 = vld [vmem:[%s946 + $0x88] sm:$0xff]
        %v965 = vld [vmem:[%s946 + $0x90] sm:$0xff]
        %v966 = vld [vmem:[%s946 + $0x98] sm:$0xff]
        %v967 = vld [vmem:[%s946 + $0xa0] sm:$0xff]
        %v968 = vld [vmem:[%s946 + $0xa8] sm:$0xff]
        %v969 = vld [vmem:[%s946 + $0xb0] sm:$0xff]
        %v970 = vld [vmem:[%s946 + $0xb8] sm:$0xff]
        %v971 = vld [vmem:[%s946 + $0xc0] sm:$0xff]
        %v972 = vld [vmem:[%s946 + $0xc8] sm:$0xff]
        %v973 = vld [vmem:[%s946 + $0xd0] sm:$0xff]
        %v974 = vld [vmem:[%s946 + $0xd8] sm:$0xff]
        %v975 = vld [vmem:[%s946 + $0xe0] sm:$0xff]
        %v976 = vld [vmem:[%s946 + $0xe8] sm:$0xff]
        %v977 = vld [vmem:[%s946 + $0xf0] sm:$0xff]
        %v978 = vld [vmem:[%s946 + $0xf8] sm:$0xff]
        %v979 = vld [vmem:[%s946 + $0x100] sm:$0xff]
        %v980 = vld [vmem:[%s946 + $0x108] sm:$0xff]
        %v981 = vld [vmem:[%s946 + $0x110] sm:$0xff]
        %v982 = vld [vmem:[%s946 + $0x118] sm:$0xff]
        %v983 = vld [vmem:[%s946 + $0x120] sm:$0xff]
        %v984 = vld [vmem:[%s946 + $0x128] sm:$0xff]
        %v985 = vld [vmem:[%s946 + $0x130] sm:$0xff]
        %v986 = vld [vmem:[%s946 + $0x138] sm:$0xff]
        %v987 = vld [vmem:[%s946 + $0x140] sm:$0xff]
        %v988 = vld [vmem:[%s946 + $0x148] sm:$0xff]
        %v989 = vld [vmem:[%s946 + $0x150] sm:$0xff]
        %v990 = vld [vmem:[%s946 + $0x158] sm:$0xff]
        %v991 = vld [vmem:[%s946 + $0x160] sm:$0xff]
        %v992 = vld [vmem:[%s946 + $0x168] sm:$0xff]
        %v993 = vld [vmem:[%s946 + $0x170] sm:$0xff]
        %v994 = vld [vmem:[%s946 + $0x178] sm:$0xff]
        %v995 = vld [vmem:[%s946 + $0x180] sm:$0xff]
        %v996 = vld [vmem:[%s946 + $0x188] sm:$0xff]
        %v997 = vld [vmem:[%s946 + $0x190] sm:$0xff]
        %v998 = vld [vmem:[%s946 + $0x198] sm:$0xff]
        %v999 = vld [vmem:[%s946 + $0x1a0] sm:$0xff]
        %v1000 = vld [vmem:[%s946 + $0x1a8] sm:$0xff]
        %v1001 = vld [vmem:[%s946 + $0x1b0] sm:$0xff]
        %v1002 = vld [vmem:[%s946 + $0x1b8] sm:$0xff]
        %v1003 = vld [vmem:[%s946 + $0x1c0] sm:$0xff]
        %v1004 = vld [vmem:[%s946 + $0x1c8] sm:$0xff]
        %v1005 = vld [vmem:[%s946 + $0x1d0] sm:$0xff]
        %v1006 = vld [vmem:[%s946 + $0x1d8] sm:$0xff]
        %v1007 = vld [vmem:[%s946 + $0x1e0] sm:$0xff]
        %v1008 = vld [vmem:[%s946 + $0x1e8] sm:$0xff]
        %v1009 = vld [vmem:[%s946 + $0x1f0] sm:$0xff]
        %v1010 = vld [vmem:[%s946 + $0x1f8] sm:$0xff]
        %v1011 = vstv %s945
        %v1012 = vmul.f32 %v1011, %v947
        %v1013 = vmul.f32 %v1011, %v948
        %v1014 = vmul.f32 %v1011, %v949
        %v1015 = vmul.f32 %v1011, %v950
        %v1016 = vmul.f32 %v1011, %v951
        %v1017 = vmul.f32 %v1011, %v952
        %v1018 = vmul.f32 %v1011, %v953
        %v1019 = vmul.f32 %v1011, %v954
        %v1020 = vmul.f32 %v1011, %v955
        %v1021 = vmul.f32 %v1011, %v956
        %v1022 = vmul.f32 %v1011, %v957
        %v1023 = vmul.f32 %v1011, %v958
        %v1024 = vmul.f32 %v1011, %v959
        %v1025 = vmul.f32 %v1011, %v960
        %v1026 = vmul.f32 %v1011, %v961
        %v1027 = vmul.f32 %v1011, %v962
        %v1028 = vmul.f32 %v1011, %v963
        %v1029 = vmul.f32 %v1011, %v964
        %v1030 = vmul.f32 %v1011, %v965
        %v1031 = vmul.f32 %v1011, %v966
        %v1032 = vmul.f32 %v1011, %v967
        %v1033 = vmul.f32 %v1011, %v968
        %v1034 = vmul.f32 %v1011, %v969
        %v1035 = vmul.f32 %v1011, %v970
        %v1036 = vmul.f32 %v1011, %v971
        %v1037 = vmul.f32 %v1011, %v972
        %v1038 = vmul.f32 %v1011, %v973
        %v1039 = vmul.f32 %v1011, %v974
        %v1040 = vmul.f32 %v1011, %v975
        %v1041 = vmul.f32 %v1011, %v976
        %v1042 = vmul.f32 %v1011, %v977
        %v1043 = vmul.f32 %v1011, %v978
        %v1044 = vmul.f32 %v1011, %v979
        %v1045 = vmul.f32 %v1011, %v980
        %v1046 = vmul.f32 %v1011, %v981
        %v1047 = vmul.f32 %v1011, %v982
        %v1048 = vmul.f32 %v1011, %v983
        %v1049 = vmul.f32 %v1011, %v984
        %v1050 = vmul.f32 %v1011, %v985
        %v1051 = vmul.f32 %v1011, %v986
        %v1052 = vmul.f32 %v1011, %v987
        %v1053 = vmul.f32 %v1011, %v988
        %v1054 = vmul.f32 %v1011, %v989
        %v1055 = vmul.f32 %v1011, %v990
        %v1056 = vmul.f32 %v1011, %v991
        %v1057 = vmul.f32 %v1011, %v992
        %v1058 = vmul.f32 %v1011, %v993
        %v1059 = vmul.f32 %v1011, %v994
        %v1060 = vmul.f32 %v1011, %v995
        %v1061 = vmul.f32 %v1011, %v996
        %v1062 = vmul.f32 %v1011, %v997
        %v1063 = vmul.f32 %v1011, %v998
        %v1064 = vmul.f32 %v1011, %v999
        %v1065 = vmul.f32 %v1011, %v1000
        %v1066 = vmul.f32 %v1011, %v1001
        %v1067 = vmul.f32 %v1011, %v1002
        %v1068 = vmul.f32 %v1011, %v1003
        %v1069 = vmul.f32 %v1011, %v1004
        %v1070 = vmul.f32 %v1011, %v1005
        %v1071 = vmul.f32 %v1011, %v1006
        %v1072 = vmul.f32 %v1011, %v1007
        %v1073 = vmul.f32 %v1011, %v1008
        %v1074 = vmul.f32 %v1011, %v1009
        %v1075 = vmul.f32 %v1011, %v1010
        %v1076 = vadd.f32 %v685, %v1012
        %v1077 = vadd.f32 %v686, %v1013
        %v1078 = vadd.f32 %v687, %v1014
        %v1079 = vadd.f32 %v688, %v1015
        %v1080 = vadd.f32 %v689, %v1016
        %v1081 = vadd.f32 %v690, %v1017
        %v1082 = vadd.f32 %v691, %v1018
        %v1083 = vadd.f32 %v692, %v1019
        %v1084 = vadd.f32 %v693, %v1020
        %v1085 = vadd.f32 %v694, %v1021
        %v1086 = vadd.f32 %v695, %v1022
        %v1087 = vadd.f32 %v696, %v1023
        %v1088 = vadd.f32 %v697, %v1024
        %v1089 = vadd.f32 %v698, %v1025
        %v1090 = vadd.f32 %v699, %v1026
        %v1091 = vadd.f32 %v700, %v1027
        %v1092 = vadd.f32 %v701, %v1028
        %v1093 = vadd.f32 %v702, %v1029
        %v1094 = vadd.f32 %v703, %v1030
        %v1095 = vadd.f32 %v704, %v1031
        %v1096 = vadd.f32 %v705, %v1032
        %v1097 = vadd.f32 %v706, %v1033
        %v1098 = vadd.f32 %v707, %v1034
        %v1099 = vadd.f32 %v708, %v1035
        %v1100 = vadd.f32 %v709, %v1036
        %v1101 = vadd.f32 %v710, %v1037
        %v1102 = vadd.f32 %v711, %v1038
        %v1103 = vadd.f32 %v712, %v1039
        %v1104 = vadd.f32 %v713, %v1040
        %v1105 = vadd.f32 %v714, %v1041
        %v1106 = vadd.f32 %v715, %v1042
        %v1107 = vadd.f32 %v716, %v1043
        %v1108 = vadd.f32 %v717, %v1044
        %v1109 = vadd.f32 %v718, %v1045
        %v1110 = vadd.f32 %v719, %v1046
        %v1111 = vadd.f32 %v720, %v1047
        %v1112 = vadd.f32 %v721, %v1048
        %v1113 = vadd.f32 %v722, %v1049
        %v1114 = vadd.f32 %v723, %v1050
        %v1115 = vadd.f32 %v724, %v1051
        %v1116 = vadd.f32 %v725, %v1052
        %v1117 = vadd.f32 %v726, %v1053
        %v1118 = vadd.f32 %v727, %v1054
        %v1119 = vadd.f32 %v728, %v1055
        %v1120 = vadd.f32 %v729, %v1056
        %v1121 = vadd.f32 %v730, %v1057
        %v1122 = vadd.f32 %v731, %v1058
        %v1123 = vadd.f32 %v732, %v1059
        %v1124 = vadd.f32 %v733, %v1060
        %v1125 = vadd.f32 %v734, %v1061
        %v1126 = vadd.f32 %v735, %v1062
        %v1127 = vadd.f32 %v736, %v1063
        %v1128 = vadd.f32 %v737, %v1064
        %v1129 = vadd.f32 %v738, %v1065
        %v1130 = vadd.f32 %v739, %v1066
        %v1131 = vadd.f32 %v740, %v1067
        %v1132 = vadd.f32 %v741, %v1068
        %v1133 = vadd.f32 %v742, %v1069
        %v1134 = vadd.f32 %v743, %v1070
        %v1135 = vadd.f32 %v744, %v1071
        %v1136 = vadd.f32 %v745, %v1072
        %v1137 = vadd.f32 %v746, %v1073
        %v1138 = vadd.f32 %v747, %v1074
        %v1139 = vadd.f32 %v748, %v1075
        %s1140 = sld [smem:[#allocation4 + %s944]]
        %s1141 = scalar_lea.vmem [#allocation8], 1024
        %v1142 = vld [vmem:[%s1141] sm:$0xff]
        %v1143 = vld [vmem:[%s1141 + $0x8] sm:$0xff]
        %v1144 = vld [vmem:[%s1141 + $0x10] sm:$0xff]
        %v1145 = vld [vmem:[%s1141 + $0x18] sm:$0xff]
        %v1146 = vld [vmem:[%s1141 + $0x20] sm:$0xff]
        %v1147 = vld [vmem:[%s1141 + $0x28] sm:$0xff]
        %v1148 = vld [vmem:[%s1141 + $0x30] sm:$0xff]
        %v1149 = vld [vmem:[%s1141 + $0x38] sm:$0xff]
        %v1150 = vld [vmem:[%s1141 + $0x40] sm:$0xff]
        %v1151 = vld [vmem:[%s1141 + $0x48] sm:$0xff]
        %v1152 = vld [vmem:[%s1141 + $0x50] sm:$0xff]
        %v1153 = vld [vmem:[%s1141 + $0x58] sm:$0xff]
        %v1154 = vld [vmem:[%s1141 + $0x60] sm:$0xff]
        %v1155 = vld [vmem:[%s1141 + $0x68] sm:$0xff]
        %v1156 = vld [vmem:[%s1141 + $0x70] sm:$0xff]
        %v1157 = vld [vmem:[%s1141 + $0x78] sm:$0xff]
        %v1158 = vld [vmem:[%s1141 + $0x80] sm:$0xff]
        %v1159 = vld [vmem:[%s1141 + $0x88] sm:$0xff]
        %v1160 = vld [vmem:[%s1141 + $0x90] sm:$0xff]
        %v1161 = vld [vmem:[%s1141 + $0x98] sm:$0xff]
        %v1162 = vld [vmem:[%s1141 + $0xa0] sm:$0xff]
        %v1163 = vld [vmem:[%s1141 + $0xa8] sm:$0xff]
        %v1164 = vld [vmem:[%s1141 + $0xb0] sm:$0xff]
        %v1165 = vld [vmem:[%s1141 + $0xb8] sm:$0xff]
        %v1166 = vld [vmem:[%s1141 + $0xc0] sm:$0xff]
        %v1167 = vld [vmem:[%s1141 + $0xc8] sm:$0xff]
        %v1168 = vld [vmem:[%s1141 + $0xd0] sm:$0xff]
        %v1169 = vld [vmem:[%s1141 + $0xd8] sm:$0xff]
        %v1170 = vld [vmem:[%s1141 + $0xe0] sm:$0xff]
        %v1171 = vld [vmem:[%s1141 + $0xe8] sm:$0xff]
        %v1172 = vld [vmem:[%s1141 + $0xf0] sm:$0xff]
        %v1173 = vld [vmem:[%s1141 + $0xf8] sm:$0xff]
        %v1174 = vld [vmem:[%s1141 + $0x100] sm:$0xff]
        %v1175 = vld [vmem:[%s1141 + $0x108] sm:$0xff]
        %v1176 = vld [vmem:[%s1141 + $0x110] sm:$0xff]
        %v1177 = vld [vmem:[%s1141 + $0x118] sm:$0xff]
        %v1178 = vld [vmem:[%s1141 + $0x120] sm:$0xff]
        %v1179 = vld [vmem:[%s1141 + $0x128] sm:$0xff]
        %v1180 = vld [vmem:[%s1141 + $0x130] sm:$0xff]
        %v1181 = vld [vmem:[%s1141 + $0x138] sm:$0xff]
        %v1182 = vld [vmem:[%s1141 + $0x140] sm:$0xff]
        %v1183 = vld [vmem:[%s1141 + $0x148] sm:$0xff]
        %v1184 = vld [vmem:[%s1141 + $0x150] sm:$0xff]
        %v1185 = vld [vmem:[%s1141 + $0x158] sm:$0xff]
        %v1186 = vld [vmem:[%s1141 + $0x160] sm:$0xff]
        %v1187 = vld [vmem:[%s1141 + $0x168] sm:$0xff]
        %v1188 = vld [vmem:[%s1141 + $0x170] sm:$0xff]
        %v1189 = vld [vmem:[%s1141 + $0x178] sm:$0xff]
        %v1190 = vld [vmem:[%s1141 + $0x180] sm:$0xff]
        %v1191 = vld [vmem:[%s1141 + $0x188] sm:$0xff]
        %v1192 = vld [vmem:[%s1141 + $0x190] sm:$0xff]
        %v1193 = vld [vmem:[%s1141 + $0x198] sm:$0xff]
        %v1194 = vld [vmem:[%s1141 + $0x1a0] sm:$0xff]
        %v1195 = vld [vmem:[%s1141 + $0x1a8] sm:$0xff]
        %v1196 = vld [vmem:[%s1141 + $0x1b0] sm:$0xff]
        %v1197 = vld [vmem:[%s1141 + $0x1b8] sm:$0xff]
        %v1198 = vld [vmem:[%s1141 + $0x1c0] sm:$0xff]
        %v1199 = vld [vmem:[%s1141 + $0x1c8] sm:$0xff]
        %v1200 = vld [vmem:[%s1141 + $0x1d0] sm:$0xff]
        %v1201 = vld [vmem:[%s1141 + $0x1d8] sm:$0xff]
        %v1202 = vld [vmem:[%s1141 + $0x1e0] sm:$0xff]
        %v1203 = vld [vmem:[%s1141 + $0x1e8] sm:$0xff]
        %v1204 = vld [vmem:[%s1141 + $0x1f0] sm:$0xff]
        %v1205 = vld [vmem:[%s1141 + $0x1f8] sm:$0xff]
        %v1206 = vstv %s1140
        %v1207 = vmul.f32 %v1206, %v1142
        %v1208 = vmul.f32 %v1206, %v1143
        %v1209 = vmul.f32 %v1206, %v1144
        %v1210 = vmul.f32 %v1206, %v1145
        %v1211 = vmul.f32 %v1206, %v1146
        %v1212 = vmul.f32 %v1206, %v1147
        %v1213 = vmul.f32 %v1206, %v1148
        %v1214 = vmul.f32 %v1206, %v1149
        %v1215 = vmul.f32 %v1206, %v1150
        %v1216 = vmul.f32 %v1206, %v1151
        %v1217 = vmul.f32 %v1206, %v1152
        %v1218 = vmul.f32 %v1206, %v1153
        %v1219 = vmul.f32 %v1206, %v1154
        %v1220 = vmul.f32 %v1206, %v1155
        %v1221 = vmul.f32 %v1206, %v1156
        %v1222 = vmul.f32 %v1206, %v1157
        %v1223 = vmul.f32 %v1206, %v1158
        %v1224 = vmul.f32 %v1206, %v1159
        %v1225 = vmul.f32 %v1206, %v1160
        %v1226 = vmul.f32 %v1206, %v1161
        %v1227 = vmul.f32 %v1206, %v1162
        %v1228 = vmul.f32 %v1206, %v1163
        %v1229 = vmul.f32 %v1206, %v1164
        %v1230 = vmul.f32 %v1206, %v1165
        %v1231 = vmul.f32 %v1206, %v1166
        %v1232 = vmul.f32 %v1206, %v1167
        %v1233 = vmul.f32 %v1206, %v1168
        %v1234 = vmul.f32 %v1206, %v1169
        %v1235 = vmul.f32 %v1206, %v1170
        %v1236 = vmul.f32 %v1206, %v1171
        %v1237 = vmul.f32 %v1206, %v1172
        %v1238 = vmul.f32 %v1206, %v1173
        %v1239 = vmul.f32 %v1206, %v1174
        %v1240 = vmul.f32 %v1206, %v1175
        %v1241 = vmul.f32 %v1206, %v1176
        %v1242 = vmul.f32 %v1206, %v1177
        %v1243 = vmul.f32 %v1206, %v1178
        %v1244 = vmul.f32 %v1206, %v1179
        %v1245 = vmul.f32 %v1206, %v1180
        %v1246 = vmul.f32 %v1206, %v1181
        %v1247 = vmul.f32 %v1206, %v1182
        %v1248 = vmul.f32 %v1206, %v1183
        %v1249 = vmul.f32 %v1206, %v1184
        %v1250 = vmul.f32 %v1206, %v1185
        %v1251 = vmul.f32 %v1206, %v1186
        %v1252 = vmul.f32 %v1206, %v1187
        %v1253 = vmul.f32 %v1206, %v1188
        %v1254 = vmul.f32 %v1206, %v1189
        %v1255 = vmul.f32 %v1206, %v1190
        %v1256 = vmul.f32 %v1206, %v1191
        %v1257 = vmul.f32 %v1206, %v1192
        %v1258 = vmul.f32 %v1206, %v1193
        %v1259 = vmul.f32 %v1206, %v1194
        %v1260 = vmul.f32 %v1206, %v1195
        %v1261 = vmul.f32 %v1206, %v1196
        %v1262 = vmul.f32 %v1206, %v1197
        %v1263 = vmul.f32 %v1206, %v1198
        %v1264 = vmul.f32 %v1206, %v1199
        %v1265 = vmul.f32 %v1206, %v1200
        %v1266 = vmul.f32 %v1206, %v1201
        %v1267 = vmul.f32 %v1206, %v1202
        %v1268 = vmul.f32 %v1206, %v1203
        %v1269 = vmul.f32 %v1206, %v1204
        %v1270 = vmul.f32 %v1206, %v1205
        %v1271 = vadd.f32 %v880, %v1207
        %v1272 = vadd.f32 %v881, %v1208
        %v1273 = vadd.f32 %v882, %v1209
        %v1274 = vadd.f32 %v883, %v1210
        %v1275 = vadd.f32 %v884, %v1211
        %v1276 = vadd.f32 %v885, %v1212
        %v1277 = vadd.f32 %v886, %v1213
        %v1278 = vadd.f32 %v887, %v1214
        %v1279 = vadd.f32 %v888, %v1215
        %v1280 = vadd.f32 %v889, %v1216
        %v1281 = vadd.f32 %v890, %v1217
        %v1282 = vadd.f32 %v891, %v1218
        %v1283 = vadd.f32 %v892, %v1219
        %v1284 = vadd.f32 %v893, %v1220
        %v1285 = vadd.f32 %v894, %v1221
        %v1286 = vadd.f32 %v895, %v1222
        %v1287 = vadd.f32 %v896, %v1223
        %v1288 = vadd.f32 %v897, %v1224
        %v1289 = vadd.f32 %v898, %v1225
        %v1290 = vadd.f32 %v899, %v1226
        %v1291 = vadd.f32 %v900, %v1227
        %v1292 = vadd.f32 %v901, %v1228
        %v1293 = vadd.f32 %v902, %v1229
        %v1294 = vadd.f32 %v903, %v1230
        %v1295 = vadd.f32 %v904, %v1231
        %v1296 = vadd.f32 %v905, %v1232
        %v1297 = vadd.f32 %v906, %v1233
        %v1298 = vadd.f32 %v907, %v1234
        %v1299 = vadd.f32 %v908, %v1235
        %v1300 = vadd.f32 %v909, %v1236
        %v1301 = vadd.f32 %v910, %v1237
        %v1302 = vadd.f32 %v911, %v1238
        %v1303 = vadd.f32 %v912, %v1239
        %v1304 = vadd.f32 %v913, %v1240
        %v1305 = vadd.f32 %v914, %v1241
        %v1306 = vadd.f32 %v915, %v1242
        %v1307 = vadd.f32 %v916, %v1243
        %v1308 = vadd.f32 %v917, %v1244
        %v1309 = vadd.f32 %v918, %v1245
        %v1310 = vadd.f32 %v919, %v1246
        %v1311 = vadd.f32 %v920, %v1247
        %v1312 = vadd.f32 %v921, %v1248
        %v1313 = vadd.f32 %v922, %v1249
        %v1314 = vadd.f32 %v923, %v1250
        %v1315 = vadd.f32 %v924, %v1251
        %v1316 = vadd.f32 %v925, %v1252
        %v1317 = vadd.f32 %v926, %v1253
        %v1318 = vadd.f32 %v927, %v1254
        %v1319 = vadd.f32 %v928, %v1255
        %v1320 = vadd.f32 %v929, %v1256
        %v1321 = vadd.f32 %v930, %v1257
        %v1322 = vadd.f32 %v931, %v1258
        %v1323 = vadd.f32 %v932, %v1259
        %v1324 = vadd.f32 %v933, %v1260
        %v1325 = vadd.f32 %v934, %v1261
        %v1326 = vadd.f32 %v935, %v1262
        %v1327 = vadd.f32 %v936, %v1263
        %v1328 = vadd.f32 %v937, %v1264
        %v1329 = vadd.f32 %v938, %v1265
        %v1330 = vadd.f32 %v939, %v1266
        %v1331 = vadd.f32 %v940, %v1267
        %v1332 = vadd.f32 %v941, %v1268
        %v1333 = vadd.f32 %v942, %v1269
        %v1334 = vadd.f32 %v943, %v1270
        %s1335 = sadd.s32 %s292, 3
        %s1336 = sld [smem:[#allocation3 + %s1335]]
        %s1337 = scalar_lea.vmem [#allocation5], 1536
        %v1338 = vld [vmem:[%s1337] sm:$0xff]
        %v1339 = vld [vmem:[%s1337 + $0x8] sm:$0xff]
        %v1340 = vld [vmem:[%s1337 + $0x10] sm:$0xff]
        %v1341 = vld [vmem:[%s1337 + $0x18] sm:$0xff]
        %v1342 = vld [vmem:[%s1337 + $0x20] sm:$0xff]
        %v1343 = vld [vmem:[%s1337 + $0x28] sm:$0xff]
        %v1344 = vld [vmem:[%s1337 + $0x30] sm:$0xff]
        %v1345 = vld [vmem:[%s1337 + $0x38] sm:$0xff]
        %v1346 = vld [vmem:[%s1337 + $0x40] sm:$0xff]
        %v1347 = vld [vmem:[%s1337 + $0x48] sm:$0xff]
        %v1348 = vld [vmem:[%s1337 + $0x50] sm:$0xff]
        %v1349 = vld [vmem:[%s1337 + $0x58] sm:$0xff]
        %v1350 = vld [vmem:[%s1337 + $0x60] sm:$0xff]
        %v1351 = vld [vmem:[%s1337 + $0x68] sm:$0xff]
        %v1352 = vld [vmem:[%s1337 + $0x70] sm:$0xff]
        %v1353 = vld [vmem:[%s1337 + $0x78] sm:$0xff]
        %v1354 = vld [vmem:[%s1337 + $0x80] sm:$0xff]
        %v1355 = vld [vmem:[%s1337 + $0x88] sm:$0xff]
        %v1356 = vld [vmem:[%s1337 + $0x90] sm:$0xff]
        %v1357 = vld [vmem:[%s1337 + $0x98] sm:$0xff]
        %v1358 = vld [vmem:[%s1337 + $0xa0] sm:$0xff]
        %v1359 = vld [vmem:[%s1337 + $0xa8] sm:$0xff]
        %v1360 = vld [vmem:[%s1337 + $0xb0] sm:$0xff]
        %v1361 = vld [vmem:[%s1337 + $0xb8] sm:$0xff]
        %v1362 = vld [vmem:[%s1337 + $0xc0] sm:$0xff]
        %v1363 = vld [vmem:[%s1337 + $0xc8] sm:$0xff]
        %v1364 = vld [vmem:[%s1337 + $0xd0] sm:$0xff]
        %v1365 = vld [vmem:[%s1337 + $0xd8] sm:$0xff]
        %v1366 = vld [vmem:[%s1337 + $0xe0] sm:$0xff]
        %v1367 = vld [vmem:[%s1337 + $0xe8] sm:$0xff]
        %v1368 = vld [vmem:[%s1337 + $0xf0] sm:$0xff]
        %v1369 = vld [vmem:[%s1337 + $0xf8] sm:$0xff]
        %v1370 = vld [vmem:[%s1337 + $0x100] sm:$0xff]
        %v1371 = vld [vmem:[%s1337 + $0x108] sm:$0xff]
        %v1372 = vld [vmem:[%s1337 + $0x110] sm:$0xff]
        %v1373 = vld [vmem:[%s1337 + $0x118] sm:$0xff]
        %v1374 = vld [vmem:[%s1337 + $0x120] sm:$0xff]
        %v1375 = vld [vmem:[%s1337 + $0x128] sm:$0xff]
        %v1376 = vld [vmem:[%s1337 + $0x130] sm:$0xff]
        %v1377 = vld [vmem:[%s1337 + $0x138] sm:$0xff]
        %v1378 = vld [vmem:[%s1337 + $0x140] sm:$0xff]
        %v1379 = vld [vmem:[%s1337 + $0x148] sm:$0xff]
        %v1380 = vld [vmem:[%s1337 + $0x150] sm:$0xff]
        %v1381 = vld [vmem:[%s1337 + $0x158] sm:$0xff]
        %v1382 = vld [vmem:[%s1337 + $0x160] sm:$0xff]
        %v1383 = vld [vmem:[%s1337 + $0x168] sm:$0xff]
        %v1384 = vld [vmem:[%s1337 + $0x170] sm:$0xff]
        %v1385 = vld [vmem:[%s1337 + $0x178] sm:$0xff]
        %v1386 = vld [vmem:[%s1337 + $0x180] sm:$0xff]
        %v1387 = vld [vmem:[%s1337 + $0x188] sm:$0xff]
        %v1388 = vld [vmem:[%s1337 + $0x190] sm:$0xff]
        %v1389 = vld [vmem:[%s1337 + $0x198] sm:$0xff]
        %v1390 = vld [vmem:[%s1337 + $0x1a0] sm:$0xff]
        %v1391 = vld [vmem:[%s1337 + $0x1a8] sm:$0xff]
        %v1392 = vld [vmem:[%s1337 + $0x1b0] sm:$0xff]
        %v1393 = vld [vmem:[%s1337 + $0x1b8] sm:$0xff]
        %v1394 = vld [vmem:[%s1337 + $0x1c0] sm:$0xff]
        %v1395 = vld [vmem:[%s1337 + $0x1c8] sm:$0xff]
        %v1396 = vld [vmem:[%s1337 + $0x1d0] sm:$0xff]
        %v1397 = vld [vmem:[%s1337 + $0x1d8] sm:$0xff]
        %v1398 = vld [vmem:[%s1337 + $0x1e0] sm:$0xff]
        %v1399 = vld [vmem:[%s1337 + $0x1e8] sm:$0xff]
        %v1400 = vld [vmem:[%s1337 + $0x1f0] sm:$0xff]
        %v1401 = vld [vmem:[%s1337 + $0x1f8] sm:$0xff]
        %v1402 = vstv %s1336
        %v1403 = vmul.f32 %v1402, %v1338
        %v1404 = vmul.f32 %v1402, %v1339
        %v1405 = vmul.f32 %v1402, %v1340
        %v1406 = vmul.f32 %v1402, %v1341
        %v1407 = vmul.f32 %v1402, %v1342
        %v1408 = vmul.f32 %v1402, %v1343
        %v1409 = vmul.f32 %v1402, %v1344
        %v1410 = vmul.f32 %v1402, %v1345
        %v1411 = vmul.f32 %v1402, %v1346
        %v1412 = vmul.f32 %v1402, %v1347
        %v1413 = vmul.f32 %v1402, %v1348
        %v1414 = vmul.f32 %v1402, %v1349
        %v1415 = vmul.f32 %v1402, %v1350
        %v1416 = vmul.f32 %v1402, %v1351
        %v1417 = vmul.f32 %v1402, %v1352
        %v1418 = vmul.f32 %v1402, %v1353
        %v1419 = vmul.f32 %v1402, %v1354
        %v1420 = vmul.f32 %v1402, %v1355
        %v1421 = vmul.f32 %v1402, %v1356
        %v1422 = vmul.f32 %v1402, %v1357
        %v1423 = vmul.f32 %v1402, %v1358
        %v1424 = vmul.f32 %v1402, %v1359
        %v1425 = vmul.f32 %v1402, %v1360
        %v1426 = vmul.f32 %v1402, %v1361
        %v1427 = vmul.f32 %v1402, %v1362
        %v1428 = vmul.f32 %v1402, %v1363
        %v1429 = vmul.f32 %v1402, %v1364
        %v1430 = vmul.f32 %v1402, %v1365
        %v1431 = vmul.f32 %v1402, %v1366
        %v1432 = vmul.f32 %v1402, %v1367
        %v1433 = vmul.f32 %v1402, %v1368
        %v1434 = vmul.f32 %v1402, %v1369
        %v1435 = vmul.f32 %v1402, %v1370
        %v1436 = vmul.f32 %v1402, %v1371
        %v1437 = vmul.f32 %v1402, %v1372
        %v1438 = vmul.f32 %v1402, %v1373
        %v1439 = vmul.f32 %v1402, %v1374
        %v1440 = vmul.f32 %v1402, %v1375
        %v1441 = vmul.f32 %v1402, %v1376
        %v1442 = vmul.f32 %v1402, %v1377
        %v1443 = vmul.f32 %v1402, %v1378
        %v1444 = vmul.f32 %v1402, %v1379
        %v1445 = vmul.f32 %v1402, %v1380
        %v1446 = vmul.f32 %v1402, %v1381
        %v1447 = vmul.f32 %v1402, %v1382
        %v1448 = vmul.f32 %v1402, %v1383
        %v1449 = vmul.f32 %v1402, %v1384
        %v1450 = vmul.f32 %v1402, %v1385
        %v1451 = vmul.f32 %v1402, %v1386
        %v1452 = vmul.f32 %v1402, %v1387
        %v1453 = vmul.f32 %v1402, %v1388
        %v1454 = vmul.f32 %v1402, %v1389
        %v1455 = vmul.f32 %v1402, %v1390
        %v1456 = vmul.f32 %v1402, %v1391
        %v1457 = vmul.f32 %v1402, %v1392
        %v1458 = vmul.f32 %v1402, %v1393
        %v1459 = vmul.f32 %v1402, %v1394
        %v1460 = vmul.f32 %v1402, %v1395
        %v1461 = vmul.f32 %v1402, %v1396
        %v1462 = vmul.f32 %v1402, %v1397
        %v1463 = vmul.f32 %v1402, %v1398
        %v1464 = vmul.f32 %v1402, %v1399
        %v1465 = vmul.f32 %v1402, %v1400
        %v1466 = vmul.f32 %v1402, %v1401
        %v1467 = vadd.f32 %v1076, %v1403
        %v1468 = vadd.f32 %v1077, %v1404
        %v1469 = vadd.f32 %v1078, %v1405
        %v1470 = vadd.f32 %v1079, %v1406
        %v1471 = vadd.f32 %v1080, %v1407
        %v1472 = vadd.f32 %v1081, %v1408
        %v1473 = vadd.f32 %v1082, %v1409
        %v1474 = vadd.f32 %v1083, %v1410
        %v1475 = vadd.f32 %v1084, %v1411
        %v1476 = vadd.f32 %v1085, %v1412
        %v1477 = vadd.f32 %v1086, %v1413
        %v1478 = vadd.f32 %v1087, %v1414
        %v1479 = vadd.f32 %v1088, %v1415
        %v1480 = vadd.f32 %v1089, %v1416
        %v1481 = vadd.f32 %v1090, %v1417
        %v1482 = vadd.f32 %v1091, %v1418
        %v1483 = vadd.f32 %v1092, %v1419
        %v1484 = vadd.f32 %v1093, %v1420
        %v1485 = vadd.f32 %v1094, %v1421
        %v1486 = vadd.f32 %v1095, %v1422
        %v1487 = vadd.f32 %v1096, %v1423
        %v1488 = vadd.f32 %v1097, %v1424
        %v1489 = vadd.f32 %v1098, %v1425
        %v1490 = vadd.f32 %v1099, %v1426
        %v1491 = vadd.f32 %v1100, %v1427
        %v1492 = vadd.f32 %v1101, %v1428
        %v1493 = vadd.f32 %v1102, %v1429
        %v1494 = vadd.f32 %v1103, %v1430
        %v1495 = vadd.f32 %v1104, %v1431
        %v1496 = vadd.f32 %v1105, %v1432
        %v1497 = vadd.f32 %v1106, %v1433
        %v1498 = vadd.f32 %v1107, %v1434
        %v1499 = vadd.f32 %v1108, %v1435
        %v1500 = vadd.f32 %v1109, %v1436
        %v1501 = vadd.f32 %v1110, %v1437
        %v1502 = vadd.f32 %v1111, %v1438
        %v1503 = vadd.f32 %v1112, %v1439
        %v1504 = vadd.f32 %v1113, %v1440
        %v1505 = vadd.f32 %v1114, %v1441
        %v1506 = vadd.f32 %v1115, %v1442
        %v1507 = vadd.f32 %v1116, %v1443
        %v1508 = vadd.f32 %v1117, %v1444
        %v1509 = vadd.f32 %v1118, %v1445
        %v1510 = vadd.f32 %v1119, %v1446
        %v1511 = vadd.f32 %v1120, %v1447
        %v1512 = vadd.f32 %v1121, %v1448
        %v1513 = vadd.f32 %v1122, %v1449
        %v1514 = vadd.f32 %v1123, %v1450
        %v1515 = vadd.f32 %v1124, %v1451
        %v1516 = vadd.f32 %v1125, %v1452
        %v1517 = vadd.f32 %v1126, %v1453
        %v1518 = vadd.f32 %v1127, %v1454
        %v1519 = vadd.f32 %v1128, %v1455
        %v1520 = vadd.f32 %v1129, %v1456
        %v1521 = vadd.f32 %v1130, %v1457
        %v1522 = vadd.f32 %v1131, %v1458
        %v1523 = vadd.f32 %v1132, %v1459
        %v1524 = vadd.f32 %v1133, %v1460
        %v1525 = vadd.f32 %v1134, %v1461
        %v1526 = vadd.f32 %v1135, %v1462
        %v1527 = vadd.f32 %v1136, %v1463
        %v1528 = vadd.f32 %v1137, %v1464
        %v1529 = vadd.f32 %v1138, %v1465
        %v1530 = vadd.f32 %v1139, %v1466
        %s1531 = sld [smem:[#allocation4 + %s1335]]
        %s1532 = scalar_lea.vmem [#allocation8], 1536
        %v1533 = vld [vmem:[%s1532] sm:$0xff]
        %v1534 = vld [vmem:[%s1532 + $0x8] sm:$0xff]
        %v1535 = vld [vmem:[%s1532 + $0x10] sm:$0xff]
        %v1536 = vld [vmem:[%s1532 + $0x18] sm:$0xff]
        %v1537 = vld [vmem:[%s1532 + $0x20] sm:$0xff]
        %v1538 = vld [vmem:[%s1532 + $0x28] sm:$0xff]
        %v1539 = vld [vmem:[%s1532 + $0x30] sm:$0xff]
        %v1540 = vld [vmem:[%s1532 + $0x38] sm:$0xff]
        %v1541 = vld [vmem:[%s1532 + $0x40] sm:$0xff]
        %v1542 = vld [vmem:[%s1532 + $0x48] sm:$0xff]
        %v1543 = vld [vmem:[%s1532 + $0x50] sm:$0xff]
        %v1544 = vld [vmem:[%s1532 + $0x58] sm:$0xff]
        %v1545 = vld [vmem:[%s1532 + $0x60] sm:$0xff]
        %v1546 = vld [vmem:[%s1532 + $0x68] sm:$0xff]
        %v1547 = vld [vmem:[%s1532 + $0x70] sm:$0xff]
        %v1548 = vld [vmem:[%s1532 + $0x78] sm:$0xff]
        %v1549 = vld [vmem:[%s1532 + $0x80] sm:$0xff]
        %v1550 = vld [vmem:[%s1532 + $0x88] sm:$0xff]
        %v1551 = vld [vmem:[%s1532 + $0x90] sm:$0xff]
        %v1552 = vld [vmem:[%s1532 + $0x98] sm:$0xff]
        %v1553 = vld [vmem:[%s1532 + $0xa0] sm:$0xff]
        %v1554 = vld [vmem:[%s1532 + $0xa8] sm:$0xff]
        %v1555 = vld [vmem:[%s1532 + $0xb0] sm:$0xff]
        %v1556 = vld [vmem:[%s1532 + $0xb8] sm:$0xff]
        %v1557 = vld [vmem:[%s1532 + $0xc0] sm:$0xff]
        %v1558 = vld [vmem:[%s1532 + $0xc8] sm:$0xff]
        %v1559 = vld [vmem:[%s1532 + $0xd0] sm:$0xff]
        %v1560 = vld [vmem:[%s1532 + $0xd8] sm:$0xff]
        %v1561 = vld [vmem:[%s1532 + $0xe0] sm:$0xff]
        %v1562 = vld [vmem:[%s1532 + $0xe8] sm:$0xff]
        %v1563 = vld [vmem:[%s1532 + $0xf0] sm:$0xff]
        %v1564 = vld [vmem:[%s1532 + $0xf8] sm:$0xff]
        %v1565 = vld [vmem:[%s1532 + $0x100] sm:$0xff]
        %v1566 = vld [vmem:[%s1532 + $0x108] sm:$0xff]
        %v1567 = vld [vmem:[%s1532 + $0x110] sm:$0xff]
        %v1568 = vld [vmem:[%s1532 + $0x118] sm:$0xff]
        %v1569 = vld [vmem:[%s1532 + $0x120] sm:$0xff]
        %v1570 = vld [vmem:[%s1532 + $0x128] sm:$0xff]
        %v1571 = vld [vmem:[%s1532 + $0x130] sm:$0xff]
        %v1572 = vld [vmem:[%s1532 + $0x138] sm:$0xff]
        %v1573 = vld [vmem:[%s1532 + $0x140] sm:$0xff]
        %v1574 = vld [vmem:[%s1532 + $0x148] sm:$0xff]
        %v1575 = vld [vmem:[%s1532 + $0x150] sm:$0xff]
        %v1576 = vld [vmem:[%s1532 + $0x158] sm:$0xff]
        %v1577 = vld [vmem:[%s1532 + $0x160] sm:$0xff]
        %v1578 = vld [vmem:[%s1532 + $0x168] sm:$0xff]
        %v1579 = vld [vmem:[%s1532 + $0x170] sm:$0xff]
        %v1580 = vld [vmem:[%s1532 + $0x178] sm:$0xff]
        %v1581 = vld [vmem:[%s1532 + $0x180] sm:$0xff]
        %v1582 = vld [vmem:[%s1532 + $0x188] sm:$0xff]
        %v1583 = vld [vmem:[%s1532 + $0x190] sm:$0xff]
        %v1584 = vld [vmem:[%s1532 + $0x198] sm:$0xff]
        %v1585 = vld [vmem:[%s1532 + $0x1a0] sm:$0xff]
        %v1586 = vld [vmem:[%s1532 + $0x1a8] sm:$0xff]
        %v1587 = vld [vmem:[%s1532 + $0x1b0] sm:$0xff]
        %v1588 = vld [vmem:[%s1532 + $0x1b8] sm:$0xff]
        %v1589 = vld [vmem:[%s1532 + $0x1c0] sm:$0xff]
        %v1590 = vld [vmem:[%s1532 + $0x1c8] sm:$0xff]
        %v1591 = vld [vmem:[%s1532 + $0x1d0] sm:$0xff]
        %v1592 = vld [vmem:[%s1532 + $0x1d8] sm:$0xff]
        %v1593 = vld [vmem:[%s1532 + $0x1e0] sm:$0xff]
        %v1594 = vld [vmem:[%s1532 + $0x1e8] sm:$0xff]
        %v1595 = vld [vmem:[%s1532 + $0x1f0] sm:$0xff]
        %v1596 = vld [vmem:[%s1532 + $0x1f8] sm:$0xff]
        %v1597 = vstv %s1531
        %v1598 = vmul.f32 %v1597, %v1533
        %v1599 = vmul.f32 %v1597, %v1534
        %v1600 = vmul.f32 %v1597, %v1535
        %v1601 = vmul.f32 %v1597, %v1536
        %v1602 = vmul.f32 %v1597, %v1537
        %v1603 = vmul.f32 %v1597, %v1538
        %v1604 = vmul.f32 %v1597, %v1539
        %v1605 = vmul.f32 %v1597, %v1540
        %v1606 = vmul.f32 %v1597, %v1541
        %v1607 = vmul.f32 %v1597, %v1542
        %v1608 = vmul.f32 %v1597, %v1543
        %v1609 = vmul.f32 %v1597, %v1544
        %v1610 = vmul.f32 %v1597, %v1545
        %v1611 = vmul.f32 %v1597, %v1546
        %v1612 = vmul.f32 %v1597, %v1547
        %v1613 = vmul.f32 %v1597, %v1548
        %v1614 = vmul.f32 %v1597, %v1549
        %v1615 = vmul.f32 %v1597, %v1550
        %v1616 = vmul.f32 %v1597, %v1551
        %v1617 = vmul.f32 %v1597, %v1552
        %v1618 = vmul.f32 %v1597, %v1553
        %v1619 = vmul.f32 %v1597, %v1554
        %v1620 = vmul.f32 %v1597, %v1555
        %v1621 = vmul.f32 %v1597, %v1556
        %v1622 = vmul.f32 %v1597, %v1557
        %v1623 = vmul.f32 %v1597, %v1558
        %v1624 = vmul.f32 %v1597, %v1559
        %v1625 = vmul.f32 %v1597, %v1560
        %v1626 = vmul.f32 %v1597, %v1561
        %v1627 = vmul.f32 %v1597, %v1562
        %v1628 = vmul.f32 %v1597, %v1563
        %v1629 = vmul.f32 %v1597, %v1564
        %v1630 = vmul.f32 %v1597, %v1565
        %v1631 = vmul.f32 %v1597, %v1566
        %v1632 = vmul.f32 %v1597, %v1567
        %v1633 = vmul.f32 %v1597, %v1568
        %v1634 = vmul.f32 %v1597, %v1569
        %v1635 = vmul.f32 %v1597, %v1570
        %v1636 = vmul.f32 %v1597, %v1571
        %v1637 = vmul.f32 %v1597, %v1572
        %v1638 = vmul.f32 %v1597, %v1573
        %v1639 = vmul.f32 %v1597, %v1574
        %v1640 = vmul.f32 %v1597, %v1575
        %v1641 = vmul.f32 %v1597, %v1576
        %v1642 = vmul.f32 %v1597, %v1577
        %v1643 = vmul.f32 %v1597, %v1578
        %v1644 = vmul.f32 %v1597, %v1579
        %v1645 = vmul.f32 %v1597, %v1580
        %v1646 = vmul.f32 %v1597, %v1581
        %v1647 = vmul.f32 %v1597, %v1582
        %v1648 = vmul.f32 %v1597, %v1583
        %v1649 = vmul.f32 %v1597, %v1584
        %v1650 = vmul.f32 %v1597, %v1585
        %v1651 = vmul.f32 %v1597, %v1586
        %v1652 = vmul.f32 %v1597, %v1587
        %v1653 = vmul.f32 %v1597, %v1588
        %v1654 = vmul.f32 %v1597, %v1589
        %v1655 = vmul.f32 %v1597, %v1590
        %v1656 = vmul.f32 %v1597, %v1591
        %v1657 = vmul.f32 %v1597, %v1592
        %v1658 = vmul.f32 %v1597, %v1593
        %v1659 = vmul.f32 %v1597, %v1594
        %v1660 = vmul.f32 %v1597, %v1595
        %v1661 = vmul.f32 %v1597, %v1596
        %v1662 = vadd.f32 %v1271, %v1598
        %v1663 = vadd.f32 %v1272, %v1599
        %v1664 = vadd.f32 %v1273, %v1600
        %v1665 = vadd.f32 %v1274, %v1601
        %v1666 = vadd.f32 %v1275, %v1602
        %v1667 = vadd.f32 %v1276, %v1603
        %v1668 = vadd.f32 %v1277, %v1604
        %v1669 = vadd.f32 %v1278, %v1605
        %v1670 = vadd.f32 %v1279, %v1606
        %v1671 = vadd.f32 %v1280, %v1607
        %v1672 = vadd.f32 %v1281, %v1608
        %v1673 = vadd.f32 %v1282, %v1609
        %v1674 = vadd.f32 %v1283, %v1610
        %v1675 = vadd.f32 %v1284, %v1611
        %v1676 = vadd.f32 %v1285, %v1612
        %v1677 = vadd.f32 %v1286, %v1613
        %v1678 = vadd.f32 %v1287, %v1614
        %v1679 = vadd.f32 %v1288, %v1615
        %v1680 = vadd.f32 %v1289, %v1616
        %v1681 = vadd.f32 %v1290, %v1617
        %v1682 = vadd.f32 %v1291, %v1618
        %v1683 = vadd.f32 %v1292, %v1619
        %v1684 = vadd.f32 %v1293, %v1620
        %v1685 = vadd.f32 %v1294, %v1621
        %v1686 = vadd.f32 %v1295, %v1622
        %v1687 = vadd.f32 %v1296, %v1623
        %v1688 = vadd.f32 %v1297, %v1624
        %v1689 = vadd.f32 %v1298, %v1625
        %v1690 = vadd.f32 %v1299, %v1626
        %v1691 = vadd.f32 %v1300, %v1627
        %v1692 = vadd.f32 %v1301, %v1628
        %v1693 = vadd.f32 %v1302, %v1629
        %v1694 = vadd.f32 %v1303, %v1630
        %v1695 = vadd.f32 %v1304, %v1631
        %v1696 = vadd.f32 %v1305, %v1632
        %v1697 = vadd.f32 %v1306, %v1633
        %v1698 = vadd.f32 %v1307, %v1634
        %v1699 = vadd.f32 %v1308, %v1635
        %v1700 = vadd.f32 %v1309, %v1636
        %v1701 = vadd.f32 %v1310, %v1637
        %v1702 = vadd.f32 %v1311, %v1638
        %v1703 = vadd.f32 %v1312, %v1639
        %v1704 = vadd.f32 %v1313, %v1640
        %v1705 = vadd.f32 %v1314, %v1641
        %v1706 = vadd.f32 %v1315, %v1642
        %v1707 = vadd.f32 %v1316, %v1643
        %v1708 = vadd.f32 %v1317, %v1644
        %v1709 = vadd.f32 %v1318, %v1645
        %v1710 = vadd.f32 %v1319, %v1646
        %v1711 = vadd.f32 %v1320, %v1647
        %v1712 = vadd.f32 %v1321, %v1648
        %v1713 = vadd.f32 %v1322, %v1649
        %v1714 = vadd.f32 %v1323, %v1650
        %v1715 = vadd.f32 %v1324, %v1651
        %v1716 = vadd.f32 %v1325, %v1652
        %v1717 = vadd.f32 %v1326, %v1653
        %v1718 = vadd.f32 %v1327, %v1654
        %v1719 = vadd.f32 %v1328, %v1655
        %v1720 = vadd.f32 %v1329, %v1656
        %v1721 = vadd.f32 %v1330, %v1657
        %v1722 = vadd.f32 %v1331, %v1658
        %v1723 = vadd.f32 %v1332, %v1659
        %v1724 = vadd.f32 %v1333, %v1660
        %v1725 = vadd.f32 %v1334, %v1661
        %v1726 = vld [vmem:[%s217] sm:$0xff]
        %v1727 = vld [vmem:[%s217 + $0x8] sm:$0xff]
        %v1728 = vld [vmem:[%s217 + $0x10] sm:$0xff]
        %v1729 = vld [vmem:[%s217 + $0x18] sm:$0xff]
        %v1730 = vld [vmem:[%s217 + $0x20] sm:$0xff]
        %v1731 = vld [vmem:[%s217 + $0x28] sm:$0xff]
        %v1732 = vld [vmem:[%s217 + $0x30] sm:$0xff]
        %v1733 = vld [vmem:[%s217 + $0x38] sm:$0xff]
        %v1734 = vld [vmem:[%s217 + $0x40] sm:$0xff]
        %v1735 = vld [vmem:[%s217 + $0x48] sm:$0xff]
        %v1736 = vld [vmem:[%s217 + $0x50] sm:$0xff]
        %v1737 = vld [vmem:[%s217 + $0x58] sm:$0xff]
        %v1738 = vld [vmem:[%s217 + $0x60] sm:$0xff]
        %v1739 = vld [vmem:[%s217 + $0x68] sm:$0xff]
        %v1740 = vld [vmem:[%s217 + $0x70] sm:$0xff]
        %v1741 = vld [vmem:[%s217 + $0x78] sm:$0xff]
        %v1742 = vld [vmem:[%s217 + $0x80] sm:$0xff]
        %v1743 = vld [vmem:[%s217 + $0x88] sm:$0xff]
        %v1744 = vld [vmem:[%s217 + $0x90] sm:$0xff]
        %v1745 = vld [vmem:[%s217 + $0x98] sm:$0xff]
        %v1746 = vld [vmem:[%s217 + $0xa0] sm:$0xff]
        %v1747 = vld [vmem:[%s217 + $0xa8] sm:$0xff]
        %v1748 = vld [vmem:[%s217 + $0xb0] sm:$0xff]
        %v1749 = vld [vmem:[%s217 + $0xb8] sm:$0xff]
        %v1750 = vld [vmem:[%s217 + $0xc0] sm:$0xff]
        %v1751 = vld [vmem:[%s217 + $0xc8] sm:$0xff]
        %v1752 = vld [vmem:[%s217 + $0xd0] sm:$0xff]
        %v1753 = vld [vmem:[%s217 + $0xd8] sm:$0xff]
        %v1754 = vld [vmem:[%s217 + $0xe0] sm:$0xff]
        %v1755 = vld [vmem:[%s217 + $0xe8] sm:$0xff]
        %v1756 = vld [vmem:[%s217 + $0xf0] sm:$0xff]
        %v1757 = vld [vmem:[%s217 + $0xf8] sm:$0xff]
        %v1758 = vld [vmem:[%s217 + $0x100] sm:$0xff]
        %v1759 = vld [vmem:[%s217 + $0x108] sm:$0xff]
        %v1760 = vld [vmem:[%s217 + $0x110] sm:$0xff]
        %v1761 = vld [vmem:[%s217 + $0x118] sm:$0xff]
        %v1762 = vld [vmem:[%s217 + $0x120] sm:$0xff]
        %v1763 = vld [vmem:[%s217 + $0x128] sm:$0xff]
        %v1764 = vld [vmem:[%s217 + $0x130] sm:$0xff]
        %v1765 = vld [vmem:[%s217 + $0x138] sm:$0xff]
        %v1766 = vld [vmem:[%s217 + $0x140] sm:$0xff]
        %v1767 = vld [vmem:[%s217 + $0x148] sm:$0xff]
        %v1768 = vld [vmem:[%s217 + $0x150] sm:$0xff]
        %v1769 = vld [vmem:[%s217 + $0x158] sm:$0xff]
        %v1770 = vld [vmem:[%s217 + $0x160] sm:$0xff]
        %v1771 = vld [vmem:[%s217 + $0x168] sm:$0xff]
        %v1772 = vld [vmem:[%s217 + $0x170] sm:$0xff]
        %v1773 = vld [vmem:[%s217 + $0x178] sm:$0xff]
        %v1774 = vld [vmem:[%s217 + $0x180] sm:$0xff]
        %v1775 = vld [vmem:[%s217 + $0x188] sm:$0xff]
        %v1776 = vld [vmem:[%s217 + $0x190] sm:$0xff]
        %v1777 = vld [vmem:[%s217 + $0x198] sm:$0xff]
        %v1778 = vld [vmem:[%s217 + $0x1a0] sm:$0xff]
        %v1779 = vld [vmem:[%s217 + $0x1a8] sm:$0xff]
        %v1780 = vld [vmem:[%s217 + $0x1b0] sm:$0xff]
        %v1781 = vld [vmem:[%s217 + $0x1b8] sm:$0xff]
        %v1782 = vld [vmem:[%s217 + $0x1c0] sm:$0xff]
        %v1783 = vld [vmem:[%s217 + $0x1c8] sm:$0xff]
        %v1784 = vld [vmem:[%s217 + $0x1d0] sm:$0xff]
        %v1785 = vld [vmem:[%s217 + $0x1d8] sm:$0xff]
        %v1786 = vld [vmem:[%s217 + $0x1e0] sm:$0xff]
        %v1787 = vld [vmem:[%s217 + $0x1e8] sm:$0xff]
        %v1788 = vld [vmem:[%s217 + $0x1f0] sm:$0xff]
        %v1789 = vld [vmem:[%s217 + $0x1f8] sm:$0xff]
        %1790 = vmatprep.subr.mxu0 %v1663
        %1791 = vmatpush1.msra.mxu0 %v1662
        %1792 = vmatprep.subr.mxu0 %v1665
        %1793 = vmatpush1.msra.mxu0 %v1664
        %1794 = vmatprep.subr.mxu0 %v1667
        %1795 = vmatpush1.msra.mxu0 %v1666
        %1796 = vmatprep.subr.mxu0 %v1669
        %1797 = vmatpush1.msra.mxu0 %v1668
        %1798 = vmatprep.subr.mxu0 %v1671
        %1799 = vmatpush1.msra.mxu0 %v1670
        %1800 = vmatprep.subr.mxu0 %v1673
        %1801 = vmatpush1.msra.mxu0 %v1672
        %1802 = vmatprep.subr.mxu0 %v1675
        %1803 = vmatpush1.msra.mxu0 %v1674
        %1804 = vmatprep.subr.mxu0 %v1677
        %1805 = vmatpush1.msra.mxu0 %v1676
        %1806 = vmatprep.subr.mxu0 %v1679
        %1807 = vmatpush1.msra.mxu0 %v1678
        %1808 = vmatprep.subr.mxu0 %v1681
        %1809 = vmatpush1.msra.mxu0 %v1680
        %1810 = vmatprep.subr.mxu0 %v1683
        %1811 = vmatpush1.msra.mxu0 %v1682
        %1812 = vmatprep.subr.mxu0 %v1685
        %1813 = vmatpush1.msra.mxu0 %v1684
        %1814 = vmatprep.subr.mxu0 %v1687
        %1815 = vmatpush1.msra.mxu0 %v1686
        %1816 = vmatprep.subr.mxu0 %v1689
        %1817 = vmatpush1.msra.mxu0 %v1688
        %1818 = vmatprep.subr.mxu0 %v1691
        %1819 = vmatpush1.msra.mxu0 %v1690
        %1820 = vmatprep.subr.mxu0 %v1693
        %1821 = vmatpush1.msra.mxu0 %v1692
        %1822 = vmatprep.subr.mxu0 %v1695
        %1823 = vmatpush1.msra.mxu0 %v1694
        %1824 = vmatprep.subr.mxu0 %v1697
        %1825 = vmatpush1.msra.mxu0 %v1696
        %1826 = vmatprep.subr.mxu0 %v1699
        %1827 = vmatpush1.msra.mxu0 %v1698
        %1828 = vmatprep.subr.mxu0 %v1701
        %1829 = vmatpush1.msra.mxu0 %v1700
        %1830 = vmatprep.subr.mxu0 %v1703
        %1831 = vmatpush1.msra.mxu0 %v1702
        %1832 = vmatprep.subr.mxu0 %v1705
        %1833 = vmatpush1.msra.mxu0 %v1704
        %1834 = vmatprep.subr.mxu0 %v1707
        %1835 = vmatpush1.msra.mxu0 %v1706
        %1836 = vmatprep.subr.mxu0 %v1709
        %1837 = vmatpush1.msra.mxu0 %v1708
        %1838 = vmatprep.subr.mxu0 %v1711
        %1839 = vmatpush1.msra.mxu0 %v1710
        %1840 = vmatprep.subr.mxu0 %v1713
        %1841 = vmatpush1.msra.mxu0 %v1712
        %1842 = vmatprep.subr.mxu0 %v1715
        %1843 = vmatpush1.msra.mxu0 %v1714
        %1844 = vmatprep.subr.mxu0 %v1717
        %1845 = vmatpush1.msra.mxu0 %v1716
        %1846 = vmatprep.subr.mxu0 %v1719
        %1847 = vmatpush1.msra.mxu0 %v1718
        %1848 = vmatprep.subr.mxu0 %v1721
        %1849 = vmatpush1.msra.mxu0 %v1720
        %1850 = vmatprep.subr.mxu0 %v1723
        %1851 = vmatpush1.msra.mxu0 %v1722
        %1852 = vmatprep.subr.mxu0 %v1725
        %1853 = vmatpush1.msra.mxu0 %v1724
        %1854 = vmatprep.mubr.f32.mxu0 %v1468
        %1855 = vmatmul.mubr.f32.gmra.mrb[0].mxu0 %v1467
        %v1856 = vpop.f32.mrb[0].mxu0
        %v1857 = vadd.f32 0.0, %v1856
        %v1858 = vpop.f32.mrb[0].mxu0
        %v1859 = vadd.f32 0.0, %v1858
        %1860 = vmatprep.mubr.f32.mxu0 %v1470
        %1861 = vmatmul.mubr.f32.gmra.mrb[0].mxu0 %v1469
        %v1862 = vpop.f32.mrb[0].mxu0
        %v1863 = vadd.f32 0.0, %v1862
        %v1864 = vpop.f32.mrb[0].mxu0
        %v1865 = vadd.f32 0.0, %v1864
        %1866 = vmatprep.mubr.f32.mxu0 %v1472
        %1867 = vmatmul.mubr.f32.gmra.mrb[0].mxu0 %v1471
        %v1868 = vpop.f32.mrb[0].mxu0
        %v1869 = vadd.f32 0.0, %v1868
        %v1870 = vpop.f32.mrb[0].mxu0
        %v1871 = vadd.f32 0.0, %v1870
        %1872 = vmatprep.mubr.f32.mxu0 %v1474
        %1873 = vmatmul.mubr.f32.gmra.mrb[0].mxu0 %v1473
        %v1874 = vpop.f32.mrb[0].mxu0
        %v1875 = vadd.f32 0.0, %v1874
        %v1876 = vpop.f32.mrb[0].mxu0
        %v1877 = vadd.f32 0.0, %v1876
        %1878 = vmatprep.mubr.f32.mxu0 %v1476
        %1879 = vmatmul.mubr.f32.gmra.mrb[0].mxu0 %v1475
        %v1880 = vpop.f32.mrb[0].mxu0
        %v1881 = vadd.f32 0.0, %v1880
        %v1882 = vpop.f32.mrb[0].mxu0
        %v1883 = vadd.f32 0.0, %v1882
        %1884 = vmatprep.mubr.f32.mxu0 %v1478
        %1885 = vmatmul.mubr.f32.gmra.mrb[0].mxu0 %v1477
        %v1886 = vpop.f32.mrb[0].mxu0
        %v1887 = vadd.f32 0.0, %v1886
        %v1888 = vpop.f32.mrb[0].mxu0
        %v1889 = vadd.f32 0.0, %v1888
        %1890 = vmatprep.mubr.f32.mxu0 %v1480
        %1891 = vmatmul.mubr.f32.gmra.mrb[0].mxu0 %v1479
        %v1892 = vpop.f32.mrb[0].mxu0
        %v1893 = vadd.f32 0.0, %v1892
        %v1894 = vpop.f32.mrb[0].mxu0
        %v1895 = vadd.f32 0.0, %v1894
        %1896 = vmatprep.mubr.f32.mxu0 %v1482
        %1897 = vmatmul.mubr.f32.gmra.mrb[0].mxu0 %v1481
        %v1898 = vpop.f32.mrb[0].mxu0
        %v1899 = vadd.f32 0.0, %v1898
        %v1900 = vpop.f32.mrb[0].mxu0
        %v1901 = vadd.f32 0.0, %v1900
        %1902 = vmatprep.mubr.f32.mxu0 %v1484
        %1903 = vmatmul.mubr.f32.gmra.mrb[0].mxu0 %v1483
        %v1904 = vpop.f32.mrb[0].mxu0
        %v1905 = vadd.f32 0.0, %v1904
        %v1906 = vpop.f32.mrb[0].mxu0
        %v1907 = vadd.f32 0.0, %v1906
        %1908 = vmatprep.mubr.f32.mxu0 %v1486
        %1909 = vmatmul.mubr.f32.gmra.mrb[0].mxu0 %v1485
        %v1910 = vpop.f32.mrb[0].mxu0
        %v1911 = vadd.f32 0.0, %v1910
        %v1912 = vpop.f32.mrb[0].mxu0
        %v1913 = vadd.f32 0.0, %v1912
        %1914 = vmatprep.mubr.f32.mxu0 %v1488
        %1915 = vmatmul.mubr.f32.gmra.mrb[0].mxu0 %v1487
        %v1916 = vpop.f32.mrb[0].mxu0
        %v1917 = vadd.f32 0.0, %v1916
        %v1918 = vpop.f32.mrb[0].mxu0
        %v1919 = vadd.f32 0.0, %v1918
        %1920 = vmatprep.mubr.f32.mxu0 %v1490
        %1921 = vmatmul.mubr.f32.gmra.mrb[0].mxu0 %v1489
        %v1922 = vpop.f32.mrb[0].mxu0
        %v1923 = vadd.f32 0.0, %v1922
        %v1924 = vpop.f32.mrb[0].mxu0
        %v1925 = vadd.f32 0.0, %v1924
        %1926 = vmatprep.mubr.f32.mxu0 %v1492
        %1927 = vmatmul.mubr.f32.gmra.mrb[0].mxu0 %v1491
        %v1928 = vpop.f32.mrb[0].mxu0
        %v1929 = vadd.f32 0.0, %v1928
        %v1930 = vpop.f32.mrb[0].mxu0
        %v1931 = vadd.f32 0.0, %v1930
        %1932 = vmatprep.mubr.f32.mxu0 %v1494
        %1933 = vmatmul.mubr.f32.gmra.mrb[0].mxu0 %v1493
        %v1934 = vpop.f32.mrb[0].mxu0
        %v1935 = vadd.f32 0.0, %v1934
        %v1936 = vpop.f32.mrb[0].mxu0
        %v1937 = vadd.f32 0.0, %v1936
        %1938 = vmatprep.mubr.f32.mxu0 %v1496
        %1939 = vmatmul.mubr.f32.gmra.mrb[0].mxu0 %v1495
        %v1940 = vpop.f32.mrb[0].mxu0
        %v1941 = vadd.f32 0.0, %v1940
        %v1942 = vpop.f32.mrb[0].mxu0
        %v1943 = vadd.f32 0.0, %v1942
        %1944 = vmatprep.mubr.f32.mxu0 %v1498
        %1945 = vmatmul.mubr.f32.gmra.mrb[0].mxu0 %v1497
        %v1946 = vpop.f32.mrb[0].mxu0
        %v1947 = vadd.f32 0.0, %v1946
        %v1948 = vpop.f32.mrb[0].mxu0
        %v1949 = vadd.f32 0.0, %v1948
        %1950 = vmatprep.mubr.f32.mxu0 %v1500
        %1951 = vmatmul.mubr.f32.gmra.mrb[0].mxu0 %v1499
        %v1952 = vpop.f32.mrb[0].mxu0
        %v1953 = vadd.f32 0.0, %v1952
        %v1954 = vpop.f32.mrb[0].mxu0
        %v1955 = vadd.f32 0.0, %v1954
        %1956 = vmatprep.mubr.f32.mxu0 %v1502
        %1957 = vmatmul.mubr.f32.gmra.mrb[0].mxu0 %v1501
        %v1958 = vpop.f32.mrb[0].mxu0
        %v1959 = vadd.f32 0.0, %v1958
        %v1960 = vpop.f32.mrb[0].mxu0
        %v1961 = vadd.f32 0.0, %v1960
        %1962 = vmatprep.mubr.f32.mxu0 %v1504
        %1963 = vmatmul.mubr.f32.gmra.mrb[0].mxu0 %v1503
        %v1964 = vpop.f32.mrb[0].mxu0
        %v1965 = vadd.f32 0.0, %v1964
        %v1966 = vpop.f32.mrb[0].mxu0
        %v1967 = vadd.f32 0.0, %v1966
        %1968 = vmatprep.mubr.f32.mxu0 %v1506
        %1969 = vmatmul.mubr.f32.gmra.mrb[0].mxu0 %v1505
        %v1970 = vpop.f32.mrb[0].mxu0
        %v1971 = vadd.f32 0.0, %v1970
        %v1972 = vpop.f32.mrb[0].mxu0
        %v1973 = vadd.f32 0.0, %v1972
        %1974 = vmatprep.mubr.f32.mxu0 %v1508
        %1975 = vmatmul.mubr.f32.gmra.mrb[0].mxu0 %v1507
        %v1976 = vpop.f32.mrb[0].mxu0
        %v1977 = vadd.f32 0.0, %v1976
        %v1978 = vpop.f32.mrb[0].mxu0
        %v1979 = vadd.f32 0.0, %v1978
        %1980 = vmatprep.mubr.f32.mxu0 %v1510
        %1981 = vmatmul.mubr.f32.gmra.mrb[0].mxu0 %v1509
        %v1982 = vpop.f32.mrb[0].mxu0
        %v1983 = vadd.f32 0.0, %v1982
        %v1984 = vpop.f32.mrb[0].mxu0
        %v1985 = vadd.f32 0.0, %v1984
        %1986 = vmatprep.mubr.f32.mxu0 %v1512
        %1987 = vmatmul.mubr.f32.gmra.mrb[0].mxu0 %v1511
        %v1988 = vpop.f32.mrb[0].mxu0
        %v1989 = vadd.f32 0.0, %v1988
        %v1990 = vpop.f32.mrb[0].mxu0
        %v1991 = vadd.f32 0.0, %v1990
        %1992 = vmatprep.mubr.f32.mxu0 %v1514
        %1993 = vmatmul.mubr.f32.gmra.mrb[0].mxu0 %v1513
        %v1994 = vpop.f32.mrb[0].mxu0
        %v1995 = vadd.f32 0.0, %v1994
        %v1996 = vpop.f32.mrb[0].mxu0
        %v1997 = vadd.f32 0.0, %v1996
        %1998 = vmatprep.mubr.f32.mxu0 %v1516
        %1999 = vmatmul.mubr.f32.gmra.mrb[0].mxu0 %v1515
        %v2000 = vpop.f32.mrb[0].mxu0
        %v2001 = vadd.f32 0.0, %v2000
        %v2002 = vpop.f32.mrb[0].mxu0
        %v2003 = vadd.f32 0.0, %v2002
        %2004 = vmatprep.mubr.f32.mxu0 %v1518
        %2005 = vmatmul.mubr.f32.gmra.mrb[0].mxu0 %v1517
        %v2006 = vpop.f32.mrb[0].mxu0
        %v2007 = vadd.f32 0.0, %v2006
        %v2008 = vpop.f32.mrb[0].mxu0
        %v2009 = vadd.f32 0.0, %v2008
        %2010 = vmatprep.mubr.f32.mxu0 %v1520
        %2011 = vmatmul.mubr.f32.gmra.mrb[0].mxu0 %v1519
        %v2012 = vpop.f32.mrb[0].mxu0
        %v2013 = vadd.f32 0.0, %v2012
        %v2014 = vpop.f32.mrb[0].mxu0
        %v2015 = vadd.f32 0.0, %v2014
        %2016 = vmatprep.mubr.f32.mxu0 %v1522
        %2017 = vmatmul.mubr.f32.gmra.mrb[0].mxu0 %v1521
        %v2018 = vpop.f32.mrb[0].mxu0
        %v2019 = vadd.f32 0.0, %v2018
        %v2020 = vpop.f32.mrb[0].mxu0
        %v2021 = vadd.f32 0.0, %v2020
        %2022 = vmatprep.mubr.f32.mxu0 %v1524
        %2023 = vmatmul.mubr.f32.gmra.mrb[0].mxu0 %v1523
        %v2024 = vpop.f32.mrb[0].mxu0
        %v2025 = vadd.f32 0.0, %v2024
        %v2026 = vpop.f32.mrb[0].mxu0
        %v2027 = vadd.f32 0.0, %v2026
        %2028 = vmatprep.mubr.f32.mxu0 %v1526
        %2029 = vmatmul.mubr.f32.gmra.mrb[0].mxu0 %v1525
        %v2030 = vpop.f32.mrb[0].mxu0
        %v2031 = vadd.f32 0.0, %v2030
        %v2032 = vpop.f32.mrb[0].mxu0
        %v2033 = vadd.f32 0.0, %v2032
        %2034 = vmatprep.mubr.f32.mxu0 %v1528
        %2035 = vmatmul.mubr.f32.gmra.mrb[0].mxu0 %v1527
        %v2036 = vpop.f32.mrb[0].mxu0
        %v2037 = vadd.f32 0.0, %v2036
        %v2038 = vpop.f32.mrb[0].mxu0
        %v2039 = vadd.f32 0.0, %v2038
        %2040 = vmatprep.mubr.f32.mxu0 %v1530
        %2041 = vmatmul.mubr.f32.gmra.mrb[0].mxu0 %v1529
        %v2042 = vpop.f32.mrb[0].mxu0
        %v2043 = vadd.f32 0.0, %v2042
        %v2044 = vpop.f32.mrb[0].mxu0
        %v2045 = vadd.f32 0.0, %v2044
        %2046 = vdwg.mxu0
        %v2047 = vadd.f32 %v1726, %v1857
        %v2048 = vadd.f32 %v1727, %v1859
        %v2049 = vadd.f32 %v1728, %v1863
        %v2050 = vadd.f32 %v1729, %v1865
        %v2051 = vadd.f32 %v1730, %v1869
        %v2052 = vadd.f32 %v1731, %v1871
        %v2053 = vadd.f32 %v1732, %v1875
        %v2054 = vadd.f32 %v1733, %v1877
        %v2055 = vadd.f32 %v1734, %v1881
        %v2056 = vadd.f32 %v1735, %v1883
        %v2057 = vadd.f32 %v1736, %v1887
        %v2058 = vadd.f32 %v1737, %v1889
        %v2059 = vadd.f32 %v1738, %v1893
        %v2060 = vadd.f32 %v1739, %v1895
        %v2061 = vadd.f32 %v1740, %v1899
        %v2062 = vadd.f32 %v1741, %v1901
        %v2063 = vadd.f32 %v1742, %v1905
        %v2064 = vadd.f32 %v1743, %v1907
        %v2065 = vadd.f32 %v1744, %v1911
        %v2066 = vadd.f32 %v1745, %v1913
        %v2067 = vadd.f32 %v1746, %v1917
        %v2068 = vadd.f32 %v1747, %v1919
        %v2069 = vadd.f32 %v1748, %v1923
        %v2070 = vadd.f32 %v1749, %v1925
        %v2071 = vadd.f32 %v1750, %v1929
        %v2072 = vadd.f32 %v1751, %v1931
        %v2073 = vadd.f32 %v1752, %v1935
        %v2074 = vadd.f32 %v1753, %v1937
        %v2075 = vadd.f32 %v1754, %v1941
        %v2076 = vadd.f32 %v1755, %v1943
        %v2077 = vadd.f32 %v1756, %v1947
        %v2078 = vadd.f32 %v1757, %v1949
        %v2079 = vadd.f32 %v1758, %v1953
        %v2080 = vadd.f32 %v1759, %v1955
        %v2081 = vadd.f32 %v1760, %v1959
        %v2082 = vadd.f32 %v1761, %v1961
        %v2083 = vadd.f32 %v1762, %v1965
        %v2084 = vadd.f32 %v1763, %v1967
        %v2085 = vadd.f32 %v1764, %v1971
        %v2086 = vadd.f32 %v1765, %v1973
        %v2087 = vadd.f32 %v1766, %v1977
        %v2088 = vadd.f32 %v1767, %v1979
        %v2089 = vadd.f32 %v1768, %v1983
        %v2090 = vadd.f32 %v1769, %v1985
        %v2091 = vadd.f32 %v1770, %v1989
        %v2092 = vadd.f32 %v1771, %v1991
        %v2093 = vadd.f32 %v1772, %v1995
        %v2094 = vadd.f32 %v1773, %v1997
        %v2095 = vadd.f32 %v1774, %v2001
        %v2096 = vadd.f32 %v1775, %v2003
        %v2097 = vadd.f32 %v1776, %v2007
        %v2098 = vadd.f32 %v1777, %v2009
        %v2099 = vadd.f32 %v1778, %v2013
        %v2100 = vadd.f32 %v1779, %v2015
        %v2101 = vadd.f32 %v1780, %v2019
        %v2102 = vadd.f32 %v1781, %v2021
        %v2103 = vadd.f32 %v1782, %v2025
        %v2104 = vadd.f32 %v1783, %v2027
        %v2105 = vadd.f32 %v1784, %v2031
        %v2106 = vadd.f32 %v1785, %v2033
        %v2107 = vadd.f32 %v1786, %v2037
        %v2108 = vadd.f32 %v1787, %v2039
        %v2109 = vadd.f32 %v1788, %v2043
        %v2110 = vadd.f32 %v1789, %v2045
        %2111 = vst [vmem:[%s217] sm:$0xff] %v2047
        %2112 = vst [vmem:[%s217 + $0x8] sm:$0xff] %v2048
        %2113 = vst [vmem:[%s217 + $0x10] sm:$0xff] %v2049
        %2114 = vst [vmem:[%s217 + $0x18] sm:$0xff] %v2050
        %2115 = vst [vmem:[%s217 + $0x20] sm:$0xff] %v2051
        %2116 = vst [vmem:[%s217 + $0x28] sm:$0xff] %v2052
        %2117 = vst [vmem:[%s217 + $0x30] sm:$0xff] %v2053
        %2118 = vst [vmem:[%s217 + $0x38] sm:$0xff] %v2054
        %2119 = vst [vmem:[%s217 + $0x40] sm:$0xff] %v2055
        %2120 = vst [vmem:[%s217 + $0x48] sm:$0xff] %v2056
        %2121 = vst [vmem:[%s217 + $0x50] sm:$0xff] %v2057
        %2122 = vst [vmem:[%s217 + $0x58] sm:$0xff] %v2058
        %2123 = vst [vmem:[%s217 + $0x60] sm:$0xff] %v2059
        %2124 = vst [vmem:[%s217 + $0x68] sm:$0xff] %v2060
        %2125 = vst [vmem:[%s217 + $0x70] sm:$0xff] %v2061
        %2126 = vst [vmem:[%s217 + $0x78] sm:$0xff] %v2062
        %2127 = vst [vmem:[%s217 + $0x80] sm:$0xff] %v2063
        %2128 = vst [vmem:[%s217 + $0x88] sm:$0xff] %v2064
        %2129 = vst [vmem:[%s217 + $0x90] sm:$0xff] %v2065
        %2130 = vst [vmem:[%s217 + $0x98] sm:$0xff] %v2066
        %2131 = vst [vmem:[%s217 + $0xa0] sm:$0xff] %v2067
        %2132 = vst [vmem:[%s217 + $0xa8] sm:$0xff] %v2068
        %2133 = vst [vmem:[%s217 + $0xb0] sm:$0xff] %v2069
        %2134 = vst [vmem:[%s217 + $0xb8] sm:$0xff] %v2070
        %2135 = vst [vmem:[%s217 + $0xc0] sm:$0xff] %v2071
        %2136 = vst [vmem:[%s217 + $0xc8] sm:$0xff] %v2072
        %2137 = vst [vmem:[%s217 + $0xd0] sm:$0xff] %v2073
        %2138 = vst [vmem:[%s217 + $0xd8] sm:$0xff] %v2074
        %2139 = vst [vmem:[%s217 + $0xe0] sm:$0xff] %v2075
        %2140 = vst [vmem:[%s217 + $0xe8] sm:$0xff] %v2076
        %2141 = vst [vmem:[%s217 + $0xf0] sm:$0xff] %v2077
        %2142 = vst [vmem:[%s217 + $0xf8] sm:$0xff] %v2078
        %2143 = vst [vmem:[%s217 + $0x100] sm:$0xff] %v2079
        %2144 = vst [vmem:[%s217 + $0x108] sm:$0xff] %v2080
        %2145 = vst [vmem:[%s217 + $0x110] sm:$0xff] %v2081
        %2146 = vst [vmem:[%s217 + $0x118] sm:$0xff] %v2082
        %2147 = vst [vmem:[%s217 + $0x120] sm:$0xff] %v2083
        %2148 = vst [vmem:[%s217 + $0x128] sm:$0xff] %v2084
        %2149 = vst [vmem:[%s217 + $0x130] sm:$0xff] %v2085
        %2150 = vst [vmem:[%s217 + $0x138] sm:$0xff] %v2086
        %2151 = vst [vmem:[%s217 + $0x140] sm:$0xff] %v2087
        %2152 = vst [vmem:[%s217 + $0x148] sm:$0xff] %v2088
        %2153 = vst [vmem:[%s217 + $0x150] sm:$0xff] %v2089
        %2154 = vst [vmem:[%s217 + $0x158] sm:$0xff] %v2090
        %2155 = vst [vmem:[%s217 + $0x160] sm:$0xff] %v2091
        %2156 = vst [vmem:[%s217 + $0x168] sm:$0xff] %v2092
        %2157 = vst [vmem:[%s217 + $0x170] sm:$0xff] %v2093
        %2158 = vst [vmem:[%s217 + $0x178] sm:$0xff] %v2094
        %2159 = vst [vmem:[%s217 + $0x180] sm:$0xff] %v2095
        %2160 = vst [vmem:[%s217 + $0x188] sm:$0xff] %v2096
        %2161 = vst [vmem:[%s217 + $0x190] sm:$0xff] %v2097
        %2162 = vst [vmem:[%s217 + $0x198] sm:$0xff] %v2098
        %2163 = vst [vmem:[%s217 + $0x1a0] sm:$0xff] %v2099
        %2164 = vst [vmem:[%s217 + $0x1a8] sm:$0xff] %v2100
        %2165 = vst [vmem:[%s217 + $0x1b0] sm:$0xff] %v2101
        %2166 = vst [vmem:[%s217 + $0x1b8] sm:$0xff] %v2102
        %2167 = vst [vmem:[%s217 + $0x1c0] sm:$0xff] %v2103
        %2168 = vst [vmem:[%s217 + $0x1c8] sm:$0xff] %v2104
        %2169 = vst [vmem:[%s217 + $0x1d0] sm:$0xff] %v2105
        %2170 = vst [vmem:[%s217 + $0x1d8] sm:$0xff] %v2106
        %2171 = vst [vmem:[%s217 + $0x1e0] sm:$0xff] %v2107
        %2172 = vst [vmem:[%s217 + $0x1e8] sm:$0xff] %v2108
        %2173 = vst [vmem:[%s217 + $0x1f0] sm:$0xff] %v2109
        %2174 = vst [vmem:[%s217 + $0x1f8] sm:$0xff] %v2110
        %s2175 = sand.u32 %s122, 1
        %s2176 = scalar_lea.sflag [#allocation7], %s2175
        %s2177 = sand.u32 %s122, 1
        %s2178 = smul.addr %s2177, 512
        %s2179 = scalar_lea.vmem [#allocation10], %s2178
        // Predicated region
        $region41: #{tpu_custom_call.1} parent=27 // pred_check
          %p2180 = pneg %p132
        $region42: #{tpu_custom_call.1} parent=27 // pred_check_branch
          %2182 = sbr.rel (%p2180) target = $region44
        $region43: #{tpu_custom_call.1} parent=27 // pred_region
          %s2183 = smul.u32 32, %s35
          %s2184 = smul.u32 2, %s36
          %s2186 = ssub.s32 8192, 8192
          %2187 = vsyncadd %s2176, %s2186
          %s2188 = smul.addr %s2183, 2
          %s2189 = sadd.s32 %s2184, %s2188
          %s2190 = smul.addr %s34, 64
          %s2191 = sadd.s32 %s2189, %s2190
          %s2192 = smul.addr %s2191, 128
          %s2193 = scalar_lea.hbm %s4, %s2192
          %s2194 = sshll.u32 %s2179, 4
          %s2195 = int_to_ptr.vmem [resolvable:$true] %s2194
          %2200 = dma.vmem_to_hbm [thread:$0]  %s2195, 8192, %s2193, %s2176, 256, 256, 16
        $region44: #{tpu_custom_call.1} parent=27 // pred_fallthru
          _
      $region28: #{tpu_custom_call.1} parent=5 // pred_fallthru
        _
      %p2201 = scmp.le.s32.totalorder 2, %s23
      // Predicated region
      $region45: #{tpu_custom_call.1} parent=5 // pred_check
        %p2202 = pneg %p2201
      $region46: #{tpu_custom_call.1} parent=5 // pred_check_branch
        %2204 = sbr.rel (%p2202) target = $region48
      $region47: #{tpu_custom_call.1} parent=5 // pred_region
        %s2205 = ssub.s32 %s23, 2
        // Predicated region
        $region49: #{tpu_custom_call.1} parent=47 // pred_check
          %p2206 = pneg %p138
        $region50: #{tpu_custom_call.1} parent=47 // pred_check_branch
          %2208 = sbr.rel (%p2206) target = $region52
        $region51: #{tpu_custom_call.1} parent=47 // pred_region
          %s2209 = sand.u32 %s123, 1
          %s2210 = scalar_lea.sflag [#allocation7], %s2209
          %s2211 = sand.u32 %s123, 1
          %s2212 = smul.addr %s2211, 512
          %s2213 = scalar_lea.vmem [#allocation10], %s2212
          %2214 = dma.done %s2210, 8192
        $region52: #{tpu_custom_call.1} parent=47 // pred_fallthru
          _
      $region48: #{tpu_custom_call.1} parent=5 // pred_fallthru
        _
    $region6: #{tpu_custom_call.1} parent=1 // loop_footer
      %s27 = sadd.s32 1, %s23
    $region7: #{tpu_custom_call.1} parent=1 // loop_footer_branch
      %22 = sbr.rel target = $region3
    $region8: #{tpu_custom_call.1} parent=1 // loop_exit
      _
    %2215 = vsyncpa [#allocation6], 1
    %s2216 = scalar_lea.sflag [#allocation6], 1
    %2217 = vsyncpa %s2216, 1
    %2218 = vsyncpa [#allocation9], 1
    %2219 = vsyncpa [#allocation7], 1
    %s2220 = scalar_lea.sflag [#allocation7], 1
    %2221 = vsyncpa %s2220, 1

</llo_original>
